<compile_context>
chip_gen: v5e
topology: v5e:2x2
jax: 0.10.0
libtpu: 0.0.40
codegen_flags: <defaults>
</compile_context>

<pallas_src>
import functools

import jax
import jax.numpy as jnp
import numpy as np
from jax.experimental import pallas as pl
from jax.experimental.pallas import tpu as pltpu


def _round_up(a, b):
    return ((a + b - 1) // b) * b


# -----------------------------------------------------------------------------
# Kernel 1: batched featurizer + classifier + softmax-entropy + one-hot argmax.
# Grid = (batch tiles ["parallel"], HW tiles ["arbitrary"]).
#   x block (TILE_N, C, tHW) bf16 is consumed in natural NCHW order (no wrapper
#   transpose over HBM); z output block doubles as the pooled-sum accumulator.
# -----------------------------------------------------------------------------
def _feat_cls_kernel(x_ref, w1t_ref, wct_ref, z_ref, stats_ref, *,
                     num_classes, tile_n, inv_hw):
    j = pl.program_id(1)

    @pl.when(j == 0)
    def _init():
        z_ref[...] = jnp.zeros_like(z_ref)

    w1t = w1t_ref[...]                                           # (F, C) bf16
    feat = z_ref.shape[1]
    row_ids = jax.lax.broadcasted_iota(jnp.int32, (tile_n, feat), 0)
    zsum = jnp.zeros((tile_n, feat), jnp.float32)
    for t in range(tile_n):                                      # static unroll
        # 1x1 conv as matmul, lane-dense over the HW tile; bf16 in, f32 out.
        h = jnp.dot(w1t, x_ref[t], preferred_element_type=jnp.float32)  # (F, tHW)
        h = jnp.maximum(h, 0.0)
        r = jnp.sum(h, axis=1)                                   # (F,)
        zsum = jnp.where(row_ids == t, r[None, :], zsum)
    z_ref[...] += zsum                                           # pooled-sum acc

    @pl.when(j == pl.num_programs(1) - 1)
    def _finalize():
        z = z_ref[...] * inv_hw                                  # global mean pool
        z_ref[...] = z
        # Classifier + entropy + argmax epilogue all in f32.
        p = jnp.dot(z, wct_ref[...], preferred_element_type=jnp.float32)  # (T, K)
        m = jnp.max(p, axis=1, keepdims=True)
        e = jnp.exp(p - m)
        s = jnp.sum(e, axis=1, keepdims=True)
        lse = m + jnp.log(s)
        ent = lse - jnp.sum((e / s) * p, axis=1, keepdims=True)  # (T, 1)
        colk = jax.lax.broadcasted_iota(jnp.int32, p.shape, 1)
        idx = jnp.min(jnp.where(p >= m, colk, num_classes), axis=1,
                      keepdims=True)                             # first argmax
        # Lane-dense output slab: one-hot(argmax) in lanes [0:K], entropy in lane K.
        cols = jax.lax.broadcasted_iota(jnp.int32, stats_ref.shape, 1)
        stats_ref[...] = ((cols == idx).astype(jnp.float32)
                          + ent * (cols == num_classes).astype(jnp.float32))


def _featurize_classify(x_nchw, w1, wc, *, tile_n=8, tile_hw=None):
    n, c, h, w = x_nchw.shape
    hw = h * w
    f = w1.shape[1]
    k = wc.shape[0]

    if tile_hw is None:
        tile_hw = hw
        for cand in (2048, 1024, 512, 256, 128):   # largest lane tile dividing HW
            if hw % cand == 0:
                tile_hw = cand
                break
    assert hw % tile_hw == 0, (hw, tile_hw)

    # Pad batch to a multiple of TILE_N (padded rows are zeros and sliced away).
    # Note (v7x): for real batches keep n_pad // tile_n >= 2 so the "parallel"
    # axis actually splits across both TensorCores.
    n_pad = _round_up(n, tile_n)
    x3 = x_nchw.reshape(n, c, hw).astype(jnp.bfloat16)   # NCHW -> (N, C, HW)
    if n_pad != n:
        x3 = jnp.concatenate(
            [x3, jnp.zeros((n_pad - n, c, hw), jnp.bfloat16)], axis=0)

    w1t = jnp.transpose(w1).astype(jnp.bfloat16)         # (F, C) bf16
    wct = jnp.transpose(wc)                              # (F, K) f32 (tiny)

    slab = _round_up(k + 1, 128)                         # yhat [0:K], ent at lane K
    kernel = functools.partial(_feat_cls_kernel, num_classes=k,
                               tile_n=tile_n, inv_hw=1.0 / hw)

    z, stats = pl.pallas_call(
        kernel,
        grid=(n_pad // tile_n, hw // tile_hw),
        in_specs=[
            pl.BlockSpec((tile_n, c, tile_hw), lambda i, j: (i, 0, j)),
            pl.BlockSpec((f, c), lambda i, j: (0, 0)),
            pl.BlockSpec((f, k), lambda i, j: (0, 0)),
        ],
        out_specs=(
            pl.BlockSpec((tile_n, f), lambda i, j: (i, 0)),
            pl.BlockSpec((tile_n, slab), lambda i, j: (i, 0)),
        ),
        out_shape=(
            jax.ShapeDtypeStruct((n_pad, f), jnp.float32),
            jax.ShapeDtypeStruct((n_pad, slab), jnp.float32),
        ),
        compiler_params=pltpu.CompilerParams(
            dimension_semantics=("parallel", "arbitrary")),
    )(x3, w1t, wct)
    return z[:n], stats[:n, :k], stats[:n, k]


# -----------------------------------------------------------------------------
# Kernel 2: T3A head, tiled over the support axis M ("arbitrary").
#   row-normalize + mask -> accumulate S^T @ L via dot_general (contract over M,
#   no in-kernel transpose) -> column-normalize + z @ W on the final step.
# -----------------------------------------------------------------------------
def _t3a_head_kernel(sup_ref, lab_ref, mask_ref, z_ref, out_ref, acc_ref):
    i = pl.program_id(0)

    @pl.when(i == 0)
    def _init():
        acc_ref[...] = jnp.zeros_like(acc_ref)

    sup = sup_ref[...]                                           # (tile_m, F)
    row_norm = jnp.sqrt(jnp.sum(sup * sup, axis=1, keepdims=True))
    sup_nm = (sup / jnp.maximum(row_norm, 1e-12)) * mask_ref[...]
    acc_ref[...] += jax.lax.dot_general(
        sup_nm, lab_ref[...],
        dimension_numbers=(((0,), (0,)), ((), ())),              # contract over M
        preferred_element_type=jnp.float32)                      # -> (F, K)

    @pl.when(i == pl.num_programs(0) - 1)
    def _finalize():
        wts = acc_ref[...]
        col_norm = jnp.sqrt(jnp.sum(wts * wts, axis=0, keepdims=True))
        wts_n = wts / jnp.maximum(col_norm, 1e-12)
        out_ref[...] = jnp.dot(z_ref[...], wts_n,
                               preferred_element_type=jnp.float32)


def _t3a_head(supports, labels, mask, z, *, tile_m=None):
    m, f = supports.shape
    k = labels.shape[1]
    n = z.shape[0]
    if tile_m is None:
        tile_m = min(512, _round_up(m, 8))
    m_pad = _round_up(m, tile_m)
    if m_pad != m:
        pad = m_pad - m
        supports = jnp.concatenate([supports, jnp.zeros((pad, f), supports.dtype)], 0)
        labels = jnp.concatenate([labels, jnp.zeros((pad, k), labels.dtype)], 0)
        mask = jnp.concatenate([mask, jnp.zeros((pad, 1), mask.dtype)], 0)

    return pl.pallas_call(
        _t3a_head_kernel,
        grid=(m_pad // tile_m,),
        in_specs=[
            pl.BlockSpec((tile_m, f), lambda i: (i, 0)),
            pl.BlockSpec((tile_m, k), lambda i: (i, 0)),
            pl.BlockSpec((tile_m, 1), lambda i: (i, 0)),
            pl.BlockSpec((n, f), lambda i: (0, 0)),
        ],
        out_specs=pl.BlockSpec((n, k), lambda i: (0, 0)),
        out_shape=jax.ShapeDtypeStruct((n, k), jnp.float32),
        scratch_shapes=[pltpu.VMEM((f, k), jnp.float32)],
        compiler_params=pltpu.CompilerParams(
            dimension_semantics=("arbitrary",)),
    )(supports, labels, mask, z)


# -----------------------------------------------------------------------------
# Support selection (torch.sort / per-class top-K) as an order-invariant mask.
# Done in plain JAX (data-dependent sort has no clean Pallas equivalent).
# -----------------------------------------------------------------------------
def _select_support_mask(ent_all, labels_all, filter_k):
    m = ent_all.shape[0]
    num_classes = labels_all.shape[1]
    cls = jnp.argmax(labels_all, axis=1)
    kk = m if filter_k < 0 else min(int(filter_k), m)
    inf = jnp.asarray(jnp.inf, ent_all.dtype)

    def per_class(c):
        masked = jnp.where(cls == c, ent_all, inf)
        vals, idxs = jax.lax.top_k(-masked, kk)   # kk lowest entropies; ties -> lower index
        keep = (vals > -inf).astype(jnp.float32)
        return jnp.zeros((m,), jnp.float32).at[idxs].add(keep)

    masks = jax.vmap(per_class)(jnp.arange(num_classes))
    return jnp.sum(masks, axis=0)[:, None]        # (M, 1) 0/1 mask


# -----------------------------------------------------------------------------
# T3A module: init state + forward
# -----------------------------------------------------------------------------
def _softmax_entropy(p):
    m = jnp.max(p, axis=1, keepdims=True)
    e = jnp.exp(p - m)
    s = jnp.sum(e, axis=1, keepdims=True)
    return ((m + jnp.log(s)) - jnp.sum((e / s) * p, axis=1, keepdims=True))[:, 0]


def t3a_init_state(wc):
    """Warmup state from the classifier weight (matches T3A.__init__)."""
    k = wc.shape[0]
    warmup_prob = wc @ wc.T
    warmup_ent = _softmax_entropy(warmup_prob)
    warmup_labels = jax.nn.one_hot(jnp.argmax(warmup_prob, axis=1), k,
                                   dtype=jnp.float32)
    return wc, warmup_labels, warmup_ent


@functools.partial(jax.jit, static_argnames=("filter_k", "tile_hw"))
def t3a_forward(x_nchw, w1, wc, supports, labels, ent, *, filter_k=100,
                tile_hw=None):
    z, yhat, ent_new = _featurize_classify(x_nchw, w1, wc, tile_hw=tile_hw)

    supports_all = jnp.concatenate([supports, z], axis=0)
    labels_all = jnp.concatenate([labels, yhat], axis=0)
    ent_all = jnp.concatenate([ent, ent_new], axis=0)

    mask = _select_support_mask(ent_all, labels_all, filter_k)
    out = _t3a_head(supports_all, labels_all, mask, z)

    # TODO(synk): cap the stored state at num_classes*filter_K rows and update it
    # in place via input_output_aliases (PyTorch truncates after the per-class
    # sort); here state stays concat-grown and carries the selection mask.
    return out, (supports_all, labels_all, ent_all, mask)


if __name__ == "__main__":
    N, C, H, W = 2, 4, 16, 16
    FEAT, NUM_CLASSES, FILTER_K = 32, 8, 100

    key = jax.random.PRNGKey(0)
    kx, k1, k2 = jax.random.split(key, 3)
    x = jax.random.normal(kx, (N, C, H, W), jnp.float32)
    w1 = jax.random.normal(k1, (C, FEAT), jnp.float32) * 0.1            # featurizer
    wc = jax.random.normal(k2, (NUM_CLASSES, FEAT), jnp.float32) * 0.1  # classifier fc

    supports0, labels0, ent0 = t3a_init_state(wc)
    # tile_hw=128 (HW=256) exercises the multi-step HW accumulation path.
    out, state = t3a_forward(x, w1, wc, supports0, labels0, ent0,
                             filter_k=FILTER_K, tile_hw=128)
    out = jax.block_until_ready(out)

    # ---------------- numpy reference (mirrors the bf16 rounding of x / W1) ----
    def bf16_round(a):
        return np.asarray(jnp.asarray(a).astype(jnp.bfloat16).astype(jnp.float32))

    xn = bf16_round(np.asarray(x).reshape(N, C, H * W))          # (N, C, HW)
    w1n = bf16_round(np.asarray(w1))                             # (C, F)
    wcn = np.asarray(wc)                                         # (K, F)

    hh = np.maximum(np.einsum("fc,ncp->nfp", w1n.T, xn), 0.0)
    z_np = hh.mean(-1).astype(np.float32)                        # (N, F)
    p_np = z_np @ wcn.T                                          # (N, K)

    def softmax_entropy_np(p):
        m = p.max(1, keepdims=True)
        e = np.exp(p - m)
        s = e.sum(1, keepdims=True)
        return ((m + np.log(s)) - ((e / s) * p).sum(1, keepdims=True))[:, 0]

    yhat_np = np.eye(NUM_CLASSES, dtype=np.float32)[p_np.argmax(1)]
    ent_np = softmax_entropy_np(p_np)

    sup_all = np.concatenate([np.asarray(supports0), z_np], 0)
    lab_all = np.concatenate([np.asarray(labels0), yhat_np], 0)
    e_all = np.concatenate([np.asarray(ent0), ent_np], 0)

    y_cls = lab_all.argmax(1)
    keep = []
    for i in range(NUM_CLASSES):
        cls_idx = np.nonzero(y_cls == i)[0]
        order = np.argsort(e_all[cls_idx], kind="stable")
        keep.append(cls_idx[order][:FILTER_K])
    keep = np.concatenate(keep)

    sup_sel = sup_all[keep]
    lab_sel = lab_all[keep]
    sup_sel = sup_sel / np.maximum(
        np.linalg.norm(sup_sel, axis=1, keepdims=True), 1e-12)
    wts = sup_sel.T @ lab_sel
    wts = wts / np.maximum(np.linalg.norm(wts, axis=0, keepdims=True), 1e-12)
    ref_out = z_np @ wts

    supports_all_k = np.asarray(state[0])
    err_z = np.abs(supports_all_k[NUM_CLASSES:] - z_np).max()
    err_out = np.abs(np.asarray(out) - ref_out).max()
    assert np.allclose(supports_all_k[NUM_CLASSES:], z_np, atol=2e-3, rtol=2e-3), err_z
    assert np.allclose(np.asarray(out), ref_out, atol=2e-3, rtol=2e-3), err_out
    print("KERNEL_OK")
</pallas_src>

<mosaic_0001>
module attributes {stable_mosaic.version = 11 : i64} {
  func.func @_feat_cls_kernel(%arg0: i32, %arg1: i32, %arg2: memref<8x4x128xbf16, #tpu.memory_space<vmem>>, %arg3: memref<32x4xbf16, #tpu.memory_space<vmem>>, %arg4: memref<32x8xf32, #tpu.memory_space<vmem>>, %arg5: memref<8x32xf32, #tpu.memory_space<vmem>>, %arg6: memref<8x128xf32, #tpu.memory_space<vmem>>) attributes {dimension_semantics = [#tpu.dimension_semantics<parallel>, #tpu.dimension_semantics<arbitrary>], iteration_bounds = array<i64: 1, 2>, scalar_prefetch = 0 : i64, scratch_operands = 0 : i64, tpu.core_type = #tpu.core_type<tc>, window_params = [{transform_indices = @transform_0, window_bounds = array<i64: 8, 4, 128>}, {pipeline_mode = #tpu.pipeline_mode<synchronous>, transform_indices = @transform_1, window_bounds = array<i64: 32, 4>}, {pipeline_mode = #tpu.pipeline_mode<synchronous>, transform_indices = @transform_2, window_bounds = array<i64: 32, 8>}, {transform_indices = @transform_3, window_bounds = array<i64: 8, 32>}, {transform_indices = @transform_4, window_bounds = array<i64: 8, 128>}]} {
    %c0_i32 = arith.constant 0 : i32
    %0 = arith.cmpi eq, %arg1, %c0_i32 : i32
    %1 = arith.extui %0 : i1 to i32
    %c0_i32_0 = arith.constant 0 : i32
    %2 = arith.cmpi ne, %1, %c0_i32_0 : i32
    scf.if %2 {
      %cst_50 = arith.constant 0.000000e+00 : f32
      %108 = vector.broadcast %cst_50 : f32 to vector<8x32xf32>
      %c0_51 = arith.constant 0 : index
      %c0_52 = arith.constant 0 : index
      %109 = vector.load %arg5[%c0_51, %c0_52] : memref<8x32xf32, #tpu.memory_space<vmem>>, vector<8x32xf32>
      tpu.vector_store %arg5[%c0_51, %c0_52], %108 {strides = array<i32>} : memref<8x32xf32, #tpu.memory_space<vmem>>, vector<8x32xf32>,
    } else {
    }
    %c0 = arith.constant 0 : index
    %c0_1 = arith.constant 0 : index
    %3 = vector.load %arg3[%c0, %c0_1] : memref<32x4xbf16, #tpu.memory_space<vmem>>, vector<32x4xbf16>
    %4 = tpu.iota {dimensions = array<i32: 0>} : vector<8x32xi32>
    %cst = arith.constant 0.000000e+00 : f32
    %5 = vector.broadcast %cst : f32 to vector<8x32xf32>
    %c0_2 = arith.constant 0 : index
    %c0_3 = arith.constant 0 : index
    %c0_4 = arith.constant 0 : index
    %6 = vector.load %arg2[%c0_2, %c0_3, %c0_4] : memref<8x4x128xbf16, #tpu.memory_space<vmem>>, vector<1x4x128xbf16>
    %7 = vector.shape_cast %6 : vector<1x4x128xbf16> to vector<4x128xbf16>
    %cst_5 = arith.constant dense<0.000000e+00> : vector<32x128xf32>
    %8 = tpu.matmul %3, %7, %cst_5 {dimension_numbers = #tpu.dot_dimension_numbers<[1], [0], [0], [1], [0, 0, 1, 1], [], []>} : vector<32x4xbf16>, vector<4x128xbf16>, vector<32x128xf32> -> vector<32x128xf32>
    %cst_6 = arith.constant 0.000000e+00 : f32
    %9 = vector.broadcast %cst_6 : f32 to vector<32x128xf32>
    %10 = arith.maximumf %8, %9 : vector<32x128xf32>
    %cst_7 = arith.constant dense<0.000000e+00> : vector<32xf32>
    %11 = vector.multi_reduction <add>, %10, %cst_7 [1] : vector<32x128xf32> to vector<32xf32>
    %c0_i32_8 = arith.constant 0 : i32
    %12 = vector.broadcast %c0_i32_8 : i32 to vector<8x32xi32>
    %13 = arith.cmpi eq, %4, %12 : vector<8x32xi32>
    %14 = vector.shape_cast %11 : vector<32xf32> to vector<1x32xf32>
    %15 = vector.shape_cast %14 : vector<1x32xf32> to vector<1x32xf32>
    %16 = vector.broadcast %15 : vector<1x32xf32> to vector<8x32xf32>
    %17 = arith.select %13, %16, %5 : vector<8x32xi1>, vector<8x32xf32>
    %c1 = arith.constant 1 : index
    %c0_9 = arith.constant 0 : index
    %c0_10 = arith.constant 0 : index
    %18 = vector.load %arg2[%c1, %c0_9, %c0_10] : memref<8x4x128xbf16, #tpu.memory_space<vmem>>, vector<1x4x128xbf16>
    %19 = vector.shape_cast %18 : vector<1x4x128xbf16> to vector<4x128xbf16>
    %cst_11 = arith.constant dense<0.000000e+00> : vector<32x128xf32>
    %20 = tpu.matmul %3, %19, %cst_11 {dimension_numbers = #tpu.dot_dimension_numbers<[1], [0], [0], [1], [0, 0, 1, 1], [], []>} : vector<32x4xbf16>, vector<4x128xbf16>, vector<32x128xf32> -> vector<32x128xf32>
    %cst_12 = arith.constant 0.000000e+00 : f32
    %21 = vector.broadcast %cst_12 : f32 to vector<32x128xf32>
    %22 = arith.maximumf %20, %21 : vector<32x128xf32>
    %cst_13 = arith.constant dense<0.000000e+00> : vector<32xf32>
    %23 = vector.multi_reduction <add>, %22, %cst_13 [1] : vector<32x128xf32> to vector<32xf32>
    %c1_i32 = arith.constant 1 : i32
    %24 = vector.broadcast %c1_i32 : i32 to vector<8x32xi32>
    %25 = arith.cmpi eq, %4, %24 : vector<8x32xi32>
    %26 = vector.shape_cast %23 : vector<32xf32> to vector<1x32xf32>
    %27 = vector.shape_cast %26 : vector<1x32xf32> to vector<1x32xf32>
    %28 = vector.broadcast %27 : vector<1x32xf32> to vector<8x32xf32>
    %29 = arith.select %25, %28, %17 : vector<8x32xi1>, vector<8x32xf32>
    %c2 = arith.constant 2 : index
    %c0_14 = arith.constant 0 : index
    %c0_15 = arith.constant 0 : index
    %30 = vector.load %arg2[%c2, %c0_14, %c0_15] : memref<8x4x128xbf16, #tpu.memory_space<vmem>>, vector<1x4x128xbf16>
    %31 = vector.shape_cast %30 : vector<1x4x128xbf16> to vector<4x128xbf16>
    %cst_16 = arith.constant dense<0.000000e+00> : vector<32x128xf32>
    %32 = tpu.matmul %3, %31, %cst_16 {dimension_numbers = #tpu.dot_dimension_numbers<[1], [0], [0], [1], [0, 0, 1, 1], [], []>} : vector<32x4xbf16>, vector<4x128xbf16>, vector<32x128xf32> -> vector<32x128xf32>
    %cst_17 = arith.constant 0.000000e+00 : f32
    %33 = vector.broadcast %cst_17 : f32 to vector<32x128xf32>
    %34 = arith.maximumf %32, %33 : vector<32x128xf32>
    %cst_18 = arith.constant dense<0.000000e+00> : vector<32xf32>
    %35 = vector.multi_reduction <add>, %34, %cst_18 [1] : vector<32x128xf32> to vector<32xf32>
    %c2_i32 = arith.constant 2 : i32
    %36 = vector.broadcast %c2_i32 : i32 to vector<8x32xi32>
    %37 = arith.cmpi eq, %4, %36 : vector<8x32xi32>
    %38 = vector.shape_cast %35 : vector<32xf32> to vector<1x32xf32>
    %39 = vector.shape_cast %38 : vector<1x32xf32> to vector<1x32xf32>
    %40 = vector.broadcast %39 : vector<1x32xf32> to vector<8x32xf32>
    %41 = arith.select %37, %40, %29 : vector<8x32xi1>, vector<8x32xf32>
    %c3 = arith.constant 3 : index
    %c0_19 = arith.constant 0 : index
    %c0_20 = arith.constant 0 : index
    %42 = vector.load %arg2[%c3, %c0_19, %c0_20] : memref<8x4x128xbf16, #tpu.memory_space<vmem>>, vector<1x4x128xbf16>
    %43 = vector.shape_cast %42 : vector<1x4x128xbf16> to vector<4x128xbf16>
    %cst_21 = arith.constant dense<0.000000e+00> : vector<32x128xf32>
    %44 = tpu.matmul %3, %43, %cst_21 {dimension_numbers = #tpu.dot_dimension_numbers<[1], [0], [0], [1], [0, 0, 1, 1], [], []>} : vector<32x4xbf16>, vector<4x128xbf16>, vector<32x128xf32> -> vector<32x128xf32>
    %cst_22 = arith.constant 0.000000e+00 : f32
    %45 = vector.broadcast %cst_22 : f32 to vector<32x128xf32>
    %46 = arith.maximumf %44, %45 : vector<32x128xf32>
    %cst_23 = arith.constant dense<0.000000e+00> : vector<32xf32>
    %47 = vector.multi_reduction <add>, %46, %cst_23 [1] : vector<32x128xf32> to vector<32xf32>
    %c3_i32 = arith.constant 3 : i32
    %48 = vector.broadcast %c3_i32 : i32 to vector<8x32xi32>
    %49 = arith.cmpi eq, %4, %48 : vector<8x32xi32>
    %50 = vector.shape_cast %47 : vector<32xf32> to vector<1x32xf32>
    %51 = vector.shape_cast %50 : vector<1x32xf32> to vector<1x32xf32>
    %52 = vector.broadcast %51 : vector<1x32xf32> to vector<8x32xf32>
    %53 = arith.select %49, %52, %41 : vector<8x32xi1>, vector<8x32xf32>
    %c4 = arith.constant 4 : index
    %c0_24 = arith.constant 0 : index
    %c0_25 = arith.constant 0 : index
    %54 = vector.load %arg2[%c4, %c0_24, %c0_25] : memref<8x4x128xbf16, #tpu.memory_space<vmem>>, vector<1x4x128xbf16>
    %55 = vector.shape_cast %54 : vector<1x4x128xbf16> to vector<4x128xbf16>
    %cst_26 = arith.constant dense<0.000000e+00> : vector<32x128xf32>
    %56 = tpu.matmul %3, %55, %cst_26 {dimension_numbers = #tpu.dot_dimension_numbers<[1], [0], [0], [1], [0, 0, 1, 1], [], []>} : vector<32x4xbf16>, vector<4x128xbf16>, vector<32x128xf32> -> vector<32x128xf32>
    %cst_27 = arith.constant 0.000000e+00 : f32
    %57 = vector.broadcast %cst_27 : f32 to vector<32x128xf32>
    %58 = arith.maximumf %56, %57 : vector<32x128xf32>
    %cst_28 = arith.constant dense<0.000000e+00> : vector<32xf32>
    %59 = vector.multi_reduction <add>, %58, %cst_28 [1] : vector<32x128xf32> to vector<32xf32>
    %c4_i32 = arith.constant 4 : i32
    %60 = vector.broadcast %c4_i32 : i32 to vector<8x32xi32>
    %61 = arith.cmpi eq, %4, %60 : vector<8x32xi32>
    %62 = vector.shape_cast %59 : vector<32xf32> to vector<1x32xf32>
    %63 = vector.shape_cast %62 : vector<1x32xf32> to vector<1x32xf32>
    %64 = vector.broadcast %63 : vector<1x32xf32> to vector<8x32xf32>
    %65 = arith.select %61, %64, %53 : vector<8x32xi1>, vector<8x32xf32>
    %c5 = arith.constant 5 : index
    %c0_29 = arith.constant 0 : index
    %c0_30 = arith.constant 0 : index
    %66 = vector.load %arg2[%c5, %c0_29, %c0_30] : memref<8x4x128xbf16, #tpu.memory_space<vmem>>, vector<1x4x128xbf16>
    %67 = vector.shape_cast %66 : vector<1x4x128xbf16> to vector<4x128xbf16>
    %cst_31 = arith.constant dense<0.000000e+00> : vector<32x128xf32>
    %68 = tpu.matmul %3, %67, %cst_31 {dimension_numbers = #tpu.dot_dimension_numbers<[1], [0], [0], [1], [0, 0, 1, 1], [], []>} : vector<32x4xbf16>, vector<4x128xbf16>, vector<32x128xf32> -> vector<32x128xf32>
    %cst_32 = arith.constant 0.000000e+00 : f32
    %69 = vector.broadcast %cst_32 : f32 to vector<32x128xf32>
    %70 = arith.maximumf %68, %69 : vector<32x128xf32>
    %cst_33 = arith.constant dense<0.000000e+00> : vector<32xf32>
    %71 = vector.multi_reduction <add>, %70, %cst_33 [1] : vector<32x128xf32> to vector<32xf32>
    %c5_i32 = arith.constant 5 : i32
    %72 = vector.broadcast %c5_i32 : i32 to vector<8x32xi32>
    %73 = arith.cmpi eq, %4, %72 : vector<8x32xi32>
    %74 = vector.shape_cast %71 : vector<32xf32> to vector<1x32xf32>
    %75 = vector.shape_cast %74 : vector<1x32xf32> to vector<1x32xf32>
    %76 = vector.broadcast %75 : vector<1x32xf32> to vector<8x32xf32>
    %77 = arith.select %73, %76, %65 : vector<8x32xi1>, vector<8x32xf32>
    %c6 = arith.constant 6 : index
    %c0_34 = arith.constant 0 : index
    %c0_35 = arith.constant 0 : index
    %78 = vector.load %arg2[%c6, %c0_34, %c0_35] : memref<8x4x128xbf16, #tpu.memory_space<vmem>>, vector<1x4x128xbf16>
    %79 = vector.shape_cast %78 : vector<1x4x128xbf16> to vector<4x128xbf16>
    %cst_36 = arith.constant dense<0.000000e+00> : vector<32x128xf32>
    %80 = tpu.matmul %3, %79, %cst_36 {dimension_numbers = #tpu.dot_dimension_numbers<[1], [0], [0], [1], [0, 0, 1, 1], [], []>} : vector<32x4xbf16>, vector<4x128xbf16>, vector<32x128xf32> -> vector<32x128xf32>
    %cst_37 = arith.constant 0.000000e+00 : f32
    %81 = vector.broadcast %cst_37 : f32 to vector<32x128xf32>
    %82 = arith.maximumf %80, %81 : vector<32x128xf32>
    %cst_38 = arith.constant dense<0.000000e+00> : vector<32xf32>
    %83 = vector.multi_reduction <add>, %82, %cst_38 [1] : vector<32x128xf32> to vector<32xf32>
    %c6_i32 = arith.constant 6 : i32
    %84 = vector.broadcast %c6_i32 : i32 to vector<8x32xi32>
    %85 = arith.cmpi eq, %4, %84 : vector<8x32xi32>
    %86 = vector.shape_cast %83 : vector<32xf32> to vector<1x32xf32>
    %87 = vector.shape_cast %86 : vector<1x32xf32> to vector<1x32xf32>
    %88 = vector.broadcast %87 : vector<1x32xf32> to vector<8x32xf32>
    %89 = arith.select %85, %88, %77 : vector<8x32xi1>, vector<8x32xf32>
    %c7 = arith.constant 7 : index
    %c0_39 = arith.constant 0 : index
    %c0_40 = arith.constant 0 : index
    %90 = vector.load %arg2[%c7, %c0_39, %c0_40] : memref<8x4x128xbf16, #tpu.memory_space<vmem>>, vector<1x4x128xbf16>
    %91 = vector.shape_cast %90 : vector<1x4x128xbf16> to vector<4x128xbf16>
    %cst_41 = arith.constant dense<0.000000e+00> : vector<32x128xf32>
    %92 = tpu.matmul %3, %91, %cst_41 {dimension_numbers = #tpu.dot_dimension_numbers<[1], [0], [0], [1], [0, 0, 1, 1], [], []>} : vector<32x4xbf16>, vector<4x128xbf16>, vector<32x128xf32> -> vector<32x128xf32>
    %cst_42 = arith.constant 0.000000e+00 : f32
    %93 = vector.broadcast %cst_42 : f32 to vector<32x128xf32>
    %94 = arith.maximumf %92, %93 : vector<32x128xf32>
    %cst_43 = arith.constant dense<0.000000e+00> : vector<32xf32>
    %95 = vector.multi_reduction <add>, %94, %cst_43 [1] : vector<32x128xf32> to vector<32xf32>
    %c7_i32 = arith.constant 7 : i32
    %96 = vector.broadcast %c7_i32 : i32 to vector<8x32xi32>
    %97 = arith.cmpi eq, %4, %96 : vector<8x32xi32>
    %98 = vector.shape_cast %95 : vector<32xf32> to vector<1x32xf32>
    %99 = vector.shape_cast %98 : vector<1x32xf32> to vector<1x32xf32>
    %100 = vector.broadcast %99 : vector<1x32xf32> to vector<8x32xf32>
    %101 = arith.select %97, %100, %89 : vector<8x32xi1>, vector<8x32xf32>
    %c0_44 = arith.constant 0 : index
    %c0_45 = arith.constant 0 : index
    %102 = vector.load %arg5[%c0_44, %c0_45] : memref<8x32xf32, #tpu.memory_space<vmem>>, vector<8x32xf32>
    %103 = arith.addf %102, %101 : vector<8x32xf32>
    %c0_46 = arith.constant 0 : index
    %c0_47 = arith.constant 0 : index
    %104 = vector.load %arg5[%c0_46, %c0_47] : memref<8x32xf32, #tpu.memory_space<vmem>>, vector<8x32xf32>
    tpu.vector_store %arg5[%c0_46, %c0_47], %103 {strides = array<i32>} : memref<8x32xf32, #tpu.memory_space<vmem>>, vector<8x32xf32>,
    %c1_i32_48 = arith.constant 1 : i32
    %105 = arith.cmpi eq, %arg1, %c1_i32_48 : i32
    %106 = arith.extui %105 : i1 to i32
    %c0_i32_49 = arith.constant 0 : i32
    %107 = arith.cmpi ne, %106, %c0_i32_49 : i32
    scf.if %107 {
      %c0_50 = arith.constant 0 : index
      %c0_51 = arith.constant 0 : index
      %108 = vector.load %arg5[%c0_50, %c0_51] : memref<8x32xf32, #tpu.memory_space<vmem>>, vector<8x32xf32>
      %cst_52 = arith.constant 3.906250e-03 : f32
      %109 = vector.broadcast %cst_52 : f32 to vector<8x32xf32>
      %110 = arith.mulf %108, %109 : vector<8x32xf32>
      %c0_53 = arith.constant 0 : index
      %c0_54 = arith.constant 0 : index
      %111 = vector.load %arg5[%c0_53, %c0_54] : memref<8x32xf32, #tpu.memory_space<vmem>>, vector<8x32xf32>
      tpu.vector_store %arg5[%c0_53, %c0_54], %110 {strides = array<i32>} : memref<8x32xf32, #tpu.memory_space<vmem>>, vector<8x32xf32>,
      %c0_55 = arith.constant 0 : index
      %c0_56 = arith.constant 0 : index
      %112 = vector.load %arg4[%c0_55, %c0_56] : memref<32x8xf32, #tpu.memory_space<vmem>>, vector<32x8xf32>
      %cst_57 = arith.constant dense<0.000000e+00> : vector<8x8xf32>
      %113 = tpu.matmul %110, %112, %cst_57 {dimension_numbers = #tpu.dot_dimension_numbers<[1], [0], [0], [1], [0, 0, 1, 1], [], []>} : vector<8x32xf32>, vector<32x8xf32>, vector<8x8xf32> -> vector<8x8xf32>
      %cst_58 = arith.constant dense<0xFF800000> : vector<8xf32>
      %114 = vector.multi_reduction <maximumf>, %113, %cst_58 [1] : vector<8x8xf32> to vector<8xf32>
      %115 = vector.shape_cast %114 : vector<8xf32> to vector<8x1xf32>
      %116 = vector.broadcast %115 : vector<8x1xf32> to vector<8x8xf32>
      %117 = arith.subf %113, %116 : vector<8x8xf32>
      %118 = math.exp %117 : vector<8x8xf32>
      %cst_59 = arith.constant dense<0.000000e+00> : vector<8xf32>
      %119 = vector.multi_reduction <add>, %118, %cst_59 [1] : vector<8x8xf32> to vector<8xf32>
      %120 = vector.shape_cast %119 : vector<8xf32> to vector<8x1xf32>
      %121 = math.log %120 : vector<8x1xf32>
      %122 = arith.addf %115, %121 : vector<8x1xf32>
      %123 = vector.broadcast %120 : vector<8x1xf32> to vector<8x8xf32>
      %124 = arith.divf %118, %123 : vector<8x8xf32>
      %125 = arith.mulf %124, %113 : vector<8x8xf32>
      %cst_60 = arith.constant dense<0.000000e+00> : vector<8xf32>
      %126 = vector.multi_reduction <add>, %125, %cst_60 [1] : vector<8x8xf32> to vector<8xf32>
      %127 = vector.shape_cast %126 : vector<8xf32> to vector<8x1xf32>
      %128 = arith.subf %122, %127 : vector<8x1xf32>
      %129 = tpu.iota {dimensions = array<i32: 1>} : vector<8x8xi32>
      %130 = vector.broadcast %115 : vector<8x1xf32> to vector<8x8xf32>
      %131 = arith.cmpf oge, %113, %130 : vector<8x8xf32>
      %c8_i32 = arith.constant 8 : i32
      %132 = vector.broadcast %c8_i32 : i32 to vector<8x8xi32>
      %133 = arith.select %131, %129, %132 : vector<8x8xi1>, vector<8x8xi32>
      %cst_61 = arith.constant dense<2147483647> : vector<8xi32>
      %134 = vector.multi_reduction <minsi>, %133, %cst_61 [1] : vector<8x8xi32> to vector<8xi32>
      %135 = vector.shape_cast %134 : vector<8xi32> to vector<8x1xi32>
      %136 = tpu.iota {dimensions = array<i32: 1>} : vector<8x128xi32>
      %137 = vector.broadcast %135 : vector<8x1xi32> to vector<8x128xi32>
      %138 = arith.cmpi eq, %136, %137 : vector<8x128xi32>
      %139 = arith.extui %138 : vector<8x128xi1> to vector<8x128xi32>
      %140 = arith.sitofp %139 : vector<8x128xi32> to vector<8x128xf32>
      %c8_i32_62 = arith.constant 8 : i32
      %141 = vector.broadcast %c8_i32_62 : i32 to vector<8x128xi32>
      %142 = arith.cmpi eq, %136, %141 : vector<8x128xi32>
      %143 = arith.extui %142 : vector<8x128xi1> to vector<8x128xi32>
      %144 = arith.sitofp %143 : vector<8x128xi32> to vector<8x128xf32>
      %145 = vector.broadcast %128 : vector<8x1xf32> to vector<8x128xf32>
      %146 = arith.mulf %145, %144 : vector<8x128xf32>
      %147 = arith.addf %140, %146 : vector<8x128xf32>
      %c0_63 = arith.constant 0 : index
      %c0_64 = arith.constant 0 : index
      %148 = vector.load %arg6[%c0_63, %c0_64] : memref<8x128xf32, #tpu.memory_space<vmem>>, vector<8x128xf32>
      tpu.vector_store %arg6[%c0_63, %c0_64], %147 {strides = array<i32>} : memref<8x128xf32, #tpu.memory_space<vmem>>, vector<8x128xf32>,
    } else {
    }
    return
  }
  func.func @transform_0(%arg0: i32, %arg1: i32) -> (i32, i32, i32) {
    %c0_i32 = arith.constant 0 : i32
    %c0_i32_0 = arith.constant 0 : i32
    return %arg0, %c0_i32, %arg1 : i32, i32, i32
  }
  func.func @transform_1(%arg0: i32, %arg1: i32) -> (i32, i32) {
    %c0_i32 = arith.constant 0 : i32
    %c0_i32_0 = arith.constant 0 : i32
    %c0_i32_1 = arith.constant 0 : i32
    return %c0_i32, %c0_i32_0 : i32, i32
  }
  func.func @transform_2(%arg0: i32, %arg1: i32) -> (i32, i32) {
    %c0_i32 = arith.constant 0 : i32
    %c0_i32_0 = arith.constant 0 : i32
    %c0_i32_1 = arith.constant 0 : i32
    return %c0_i32, %c0_i32_0 : i32, i32
  }
  func.func @transform_3(%arg0: i32, %arg1: i32) -> (i32, i32) {
    %c0_i32 = arith.constant 0 : i32
    %c0_i32_0 = arith.constant 0 : i32
    return %arg0, %c0_i32 : i32, i32
  }
  func.func @transform_4(%arg0: i32, %arg1: i32) -> (i32, i32) {
    %c0_i32 = arith.constant 0 : i32
    %c0_i32_0 = arith.constant 0 : i32
    return %arg0, %c0_i32 : i32, i32
  }
}

module attributes {stable_mosaic.version = 11 : i64} {
  func.func @_t3a_head_kernel(%arg0: i32, %arg1: memref<16x32xf32, #tpu.memory_space<vmem>>, %arg2: memref<16x8xf32, #tpu.memory_space<vmem>>, %arg3: memref<16x1xf32, #tpu.memory_space<vmem>>, %arg4: memref<2x32xf32, #tpu.memory_space<vmem>>, %arg5: memref<2x8xf32, #tpu.memory_space<vmem>>, %arg6: memref<32x8xf32, #tpu.memory_space<vmem>>) attributes {dimension_semantics = [#tpu.dimension_semantics<arbitrary>], iteration_bounds = array<i64: 1>, scalar_prefetch = 0 : i64, scratch_operands = 1 : i64, tpu.core_type = #tpu.core_type<tc>, window_params = [{transform_indices = @transform_0, window_bounds = array<i64: 16, 32>}, {transform_indices = @transform_1, window_bounds = array<i64: 16, 8>}, {transform_indices = @transform_2, window_bounds = array<i64: 16, 1>}, {pipeline_mode = #tpu.pipeline_mode<synchronous>, transform_indices = @transform_3, window_bounds = array<i64: 2, 32>}, {pipeline_mode = #tpu.pipeline_mode<synchronous>, transform_indices = @transform_4, window_bounds = array<i64: 2, 8>}]} {
    %c0_i32 = arith.constant 0 : i32
    %0 = arith.cmpi eq, %arg0, %c0_i32 : i32
    %1 = arith.extui %0 : i1 to i32
    %c0_i32_0 = arith.constant 0 : i32
    %2 = arith.cmpi ne, %1, %c0_i32_0 : i32
    scf.if %2 {
      %cst_14 = arith.constant 0.000000e+00 : f32
      %23 = vector.broadcast %cst_14 : f32 to vector<32x8xf32>
      %c0_15 = arith.constant 0 : index
      %c0_16 = arith.constant 0 : index
      %24 = vector.load %arg6[%c0_15, %c0_16] : memref<32x8xf32, #tpu.memory_space<vmem>>, vector<32x8xf32>
      tpu.vector_store %arg6[%c0_15, %c0_16], %23 {strides = array<i32>} : memref<32x8xf32, #tpu.memory_space<vmem>>, vector<32x8xf32>,
    } else {
    }
    %c0 = arith.constant 0 : index
    %c0_1 = arith.constant 0 : index
    %3 = vector.load %arg1[%c0, %c0_1] : memref<16x32xf32, #tpu.memory_space<vmem>>, vector<16x32xf32>
    %4 = arith.mulf %3, %3 : vector<16x32xf32>
    %cst = arith.constant dense<0.000000e+00> : vector<16xf32>
    %5 = vector.multi_reduction <add>, %4, %cst [1] : vector<16x32xf32> to vector<16xf32>
    %6 = vector.shape_cast %5 : vector<16xf32> to vector<16x1xf32>
    %7 = math.sqrt %6 : vector<16x1xf32>
    %cst_2 = arith.constant 9.99999996E-13 : f32
    %8 = vector.broadcast %cst_2 : f32 to vector<16x1xf32>
    %9 = arith.maximumf %7, %8 : vector<16x1xf32>
    %10 = vector.broadcast %9 : vector<16x1xf32> to vector<16x32xf32>
    %11 = arith.divf %3, %10 : vector<16x32xf32>
    %c0_3 = arith.constant 0 : index
    %c0_4 = arith.constant 0 : index
    %12 = vector.load %arg3[%c0_3, %c0_4] : memref<16x1xf32, #tpu.memory_space<vmem>>, vector<16x1xf32>
    %13 = vector.broadcast %12 : vector<16x1xf32> to vector<16x32xf32>
    %14 = arith.mulf %11, %13 : vector<16x32xf32>
    %c0_5 = arith.constant 0 : index
    %c0_6 = arith.constant 0 : index
    %15 = vector.load %arg6[%c0_5, %c0_6] : memref<32x8xf32, #tpu.memory_space<vmem>>, vector<32x8xf32>
    %c0_7 = arith.constant 0 : index
    %c0_8 = arith.constant 0 : index
    %16 = vector.load %arg2[%c0_7, %c0_8] : memref<16x8xf32, #tpu.memory_space<vmem>>, vector<16x8xf32>
    %cst_9 = arith.constant dense<0.000000e+00> : vector<32x8xf32>
    %17 = tpu.matmul %14, %16, %cst_9 {dimension_numbers = #tpu.dot_dimension_numbers<[0], [0], [1], [1], [0, 1, 1, 1], [], []>} : vector<16x32xf32>, vector<16x8xf32>, vector<32x8xf32> -> vector<32x8xf32>
    %18 = arith.addf %15, %17 : vector<32x8xf32>
    %c0_10 = arith.constant 0 : index
    %c0_11 = arith.constant 0 : index
    %19 = vector.load %arg6[%c0_10, %c0_11] : memref<32x8xf32, #tpu.memory_space<vmem>>, vector<32x8xf32>
    tpu.vector_store %arg6[%c0_10, %c0_11], %18 {strides = array<i32>} : memref<32x8xf32, #tpu.memory_space<vmem>>, vector<32x8xf32>,
    %c0_i32_12 = arith.constant 0 : i32
    %20 = arith.cmpi eq, %arg0, %c0_i32_12 : i32
    %21 = arith.extui %20 : i1 to i32
    %c0_i32_13 = arith.constant 0 : i32
    %22 = arith.cmpi ne, %21, %c0_i32_13 : i32
    scf.if %22 {
      %c0_14 = arith.constant 0 : index
      %c0_15 = arith.constant 0 : index
      %23 = vector.load %arg6[%c0_14, %c0_15] : memref<32x8xf32, #tpu.memory_space<vmem>>, vector<32x8xf32>
      %24 = arith.mulf %23, %23 : vector<32x8xf32>
      %cst_16 = arith.constant dense<0.000000e+00> : vector<8xf32>
      %25 = vector.multi_reduction <add>, %24, %cst_16 [0] : vector<32x8xf32> to vector<8xf32>
      %26 = vector.shape_cast %25 : vector<8xf32> to vector<1x8xf32>
      %27 = math.sqrt %26 : vector<1x8xf32>
      %cst_17 = arith.constant 9.99999996E-13 : f32
      %28 = vector.broadcast %cst_17 : f32 to vector<1x8xf32>
      %29 = arith.maximumf %27, %28 : vector<1x8xf32>
      %30 = vector.broadcast %29 : vector<1x8xf32> to vector<32x8xf32>
      %31 = arith.divf %23, %30 : vector<32x8xf32>
      %c0_18 = arith.constant 0 : index
      %c0_19 = arith.constant 0 : index
      %32 = vector.load %arg4[%c0_18, %c0_19] : memref<2x32xf32, #tpu.memory_space<vmem>>, vector<2x32xf32>
      %cst_20 = arith.constant dense<0.000000e+00> : vector<2x8xf32>
      %33 = tpu.matmul %32, %31, %cst_20 {dimension_numbers = #tpu.dot_dimension_numbers<[1], [0], [0], [1], [0, 0, 1, 1], [], []>} : vector<2x32xf32>, vector<32x8xf32>, vector<2x8xf32> -> vector<2x8xf32>
      %c0_21 = arith.constant 0 : index
      %c0_22 = arith.constant 0 : index
      %34 = vector.load %arg5[%c0_21, %c0_22] : memref<2x8xf32, #tpu.memory_space<vmem>>, vector<2x8xf32>
      tpu.vector_store %arg5[%c0_21, %c0_22], %33 {strides = array<i32>} : memref<2x8xf32, #tpu.memory_space<vmem>>, vector<2x8xf32>,
    } else {
    }
    return
  }
  func.func @transform_0(%arg0: i32) -> (i32, i32) {
    %c0_i32 = arith.constant 0 : i32
    %c0_i32_0 = arith.constant 0 : i32
    return %arg0, %c0_i32 : i32, i32
  }
  func.func @transform_1(%arg0: i32) -> (i32, i32) {
    %c0_i32 = arith.constant 0 : i32
    %c0_i32_0 = arith.constant 0 : i32
    return %arg0, %c0_i32 : i32, i32
  }
  func.func @transform_2(%arg0: i32) -> (i32, i32) {
    %c0_i32 = arith.constant 0 : i32
    %c0_i32_0 = arith.constant 0 : i32
    return %arg0, %c0_i32 : i32, i32
  }
  func.func @transform_3(%arg0: i32) -> (i32, i32) {
    %c0_i32 = arith.constant 0 : i32
    %c0_i32_0 = arith.constant 0 : i32
    %c0_i32_1 = arith.constant 0 : i32
    return %c0_i32, %c0_i32_0 : i32, i32
  }
  func.func @transform_4(%arg0: i32) -> (i32, i32) {
    %c0_i32 = arith.constant 0 : i32
    %c0_i32_0 = arith.constant 0 : i32
    %c0_i32_1 = arith.constant 0 : i32
    return %c0_i32, %c0_i32_0 : i32, i32
  }
}

</mosaic_0001>

<llo_original>
// kernel: t3a_forward.3
$region0: #{t3a_forward.3}
  #allocation0 [shape = 'u32[]', space=smem, size = 0x4, offset = 0x4, fixed_abs, tag = 'smem constant byte address 0x4 - core index']
  #allocation1 [shape = 'u32[72,128]{1,0:T(1,128)}', space=vmem, size = 0x9000, scoped, tag = 'internal scratch']
  #allocation2 [shape = 'f32[32,8]{1,0:T(8,128)}', space=vmem, size = 0x4000, scoped, tag = 'scratch operand']
  %s0 = inlined_call_operand.vmem [shape: f32[16,32], index: 0, kind: input, shape index: {}]
  %s1 = inlined_call_operand.vmem [shape: f32[16,8], index: 1, kind: input, shape index: {}]
  %s2 = inlined_call_operand.vmem [shape: f32[16,1], index: 2, kind: input, shape index: {}]
  %s3 = inlined_call_operand.vmem [shape: f32[2,32], index: 3, kind: input, shape index: {}]
  %s4 = inlined_call_operand.hbm [shape: f32[2,8], index: 4, kind: output, shape index: {}]
  %s5 = sld [smem:[#allocation0]]
  $region34: #{t3a_forward.3} parent=0
    _
  %s7 = ssub.s32 1, %s5
  %s8 = scalar_select 0, %s7, %s5
  $region1: #{t3a_forward.3} parent=0
    #allocation3 [shape = 'u8[1024]{0}', space=vmem, size = 0x400, scoped, tag = 'output window, operand 0, single buffered']
    #allocation4 [shape = 's32[1]{0}', space=sflag, size = 0x4, scoped, tag = 'scoped memory for t3a_forward.3']
    %9 = vsyncpa [#allocation4], 0
    // Predicated region
    $region2: #{t3a_forward.3} parent=1 // pred_check
      _
    $region3: #{t3a_forward.3} parent=1 // pred_check_branch
      %11 = sbr.rel (0) target = $region5
    $region4: #{t3a_forward.3} parent=1 // pred_region
      _
    $region5: #{t3a_forward.3} parent=1 // pred_fallthru
      _
    // Predicated region
    $region6: #{t3a_forward.3} parent=1 // pred_check
      _
    $region7: #{t3a_forward.3} parent=1 // pred_check_branch
      %13 = sbr.rel (0) target = $region9
    $region8: #{t3a_forward.3} parent=1 // pred_region
      _
    $region9: #{t3a_forward.3} parent=1 // pred_fallthru
      _
    // Predicated region
    $region10: #{t3a_forward.3} parent=1 // pred_check
      _
    $region11: #{t3a_forward.3} parent=1 // pred_check_branch
      %15 = sbr.rel (0) target = $region13
    $region12: #{t3a_forward.3} parent=1 // pred_region
      _
    $region13: #{t3a_forward.3} parent=1 // pred_fallthru
      _
    // Predicated region
    $region14: #{t3a_forward.3} parent=1 // pred_check
      _
    $region15: #{t3a_forward.3} parent=1 // pred_check_branch
      %17 = sbr.rel (0) target = $region17
    $region16: #{t3a_forward.3} parent=1 // pred_region
      _
    $region17: #{t3a_forward.3} parent=1 // pred_fallthru
      _
    %p18 = scmp.eq.s32.totalorder 0, 0
    // Predicated region
    $region18: #{t3a_forward.3} parent=1 // pred_check
      %p19 = pneg %p18
    $region19: #{t3a_forward.3} parent=1 // pred_check_branch
      %21 = sbr.rel (%p19) target = $region21
    $region20: #{t3a_forward.3} parent=1 // pred_region
      %vm22 = vcmask 64512
      %23 = vst.msk [vmem:[#allocation2] sm:$0xff] %vm22, 0.0
      %24 = vst.msk [vmem:[#allocation2 + $0x8] sm:$0xff] %vm22, 0.0
      %25 = vst.msk [vmem:[#allocation2 + $0x10] sm:$0xff] %vm22, 0.0
      %26 = vst.msk [vmem:[#allocation2 + $0x18] sm:$0xff] %vm22, 0.0
    $region21: #{t3a_forward.3} parent=1 // pred_fallthru
      _
    %v27 = vld [vmem:[%s0] sm:$0xff]
    %v28 = vld [vmem:[%s0 + $0x8] sm:$0xff]
    %v29 = vmul.f32 %v27, %v27
    %v30 = vmul.f32 %v28, %v28
    %vm31 = vcmask 261120
    %v32 = vsel %vm31, %v29, 0.0
    %33 = vadd.xlane.f32.xlu0 %v32
    %v34 = vpop.xlane.xlu0 %33
    %v35 = vsel %vm31, %v30, 0.0
    %36 = vadd.xlane.f32.xlu0 %v35
    %v37 = vpop.xlane.xlu0 %36
    %v38 = vrsqrt.pop %v34
    %v39 = vmul.f32 %v38, %v34
    %v40 = vmul.f32 %v39, %v38
    %v41 = vmul.f32 0.5, %v40
    %v42 = vsub.f32 1.5, %v41
    %v43 = vmul.f32 %v38, %v42
    %v44 = vmul.f32 %v34, %v43
    %vm45 = vcmp.eq.f32.partialorder %v34, inf
    %v46 = vsel %vm45, %v34, %v44
    %vm47 = vcmp.eq.f32.partialorder %v34, 0.0
    %v48 = vand.u32 %v34, 2147483648
    %v49 = vsel %vm47, %v48, %v46
    %v50 = vrsqrt.pop %v37
    %v51 = vmul.f32 %v50, %v37
    %v52 = vmul.f32 %v51, %v50
    %v53 = vmul.f32 0.5, %v52
    %v54 = vsub.f32 1.5, %v53
    %v55 = vmul.f32 %v50, %v54
    %v56 = vmul.f32 %v37, %v55
    %vm57 = vcmp.eq.f32.partialorder %v37, inf
    %v58 = vsel %vm57, %v37, %v56
    %vm59 = vcmp.eq.f32.partialorder %v37, 0.0
    %v60 = vand.u32 %v37, 2147483648
    %v61 = vsel %vm59, %v60, %v58
    %v62 = vmax.f32 %v49, 1e-12
    %v63 = vmax.f32 %v61, 1e-12
    %v64 = vrcp.pop %v62
    %v65 = vmul.f32 %v62, %v64
    %v66 = vsub.f32 1.0, %v65
    %v67 = vmul.f32 %v64, %v66
    %v68 = vadd.f32 %v64, %v67
    %vm69 = vweird.f32 %v62
    %vm70 = vweird.f32 %v64
    %vm71 = vmor %vm69, %vm70
    %v72 = vsel %vm71, %v64, %v68
    %v73 = vand.u32 2147483647, %v62
    %vm74 = vcmp.eq.f32.partialorder %v73, 8.507059e+37
    %v75 = vand.u32 %v62, 2147483648
    %v76 = vor.u32 1.1754944e-38, %v75
    %v77 = vsel %vm74, %v76, %v72
    %v78 = vmul.f32 %v27, %v77
    %v79 = vrcp.pop %v63
    %v80 = vmul.f32 %v63, %v79
    %v81 = vsub.f32 1.0, %v80
    %v82 = vmul.f32 %v79, %v81
    %v83 = vadd.f32 %v79, %v82
    %vm84 = vweird.f32 %v63
    %vm85 = vweird.f32 %v79
    %vm86 = vmor %vm84, %vm85
    %v87 = vsel %vm86, %v79, %v83
    %v88 = vand.u32 2147483647, %v63
    %vm89 = vcmp.eq.f32.partialorder %v88, 8.507059e+37
    %v90 = vand.u32 %v63, 2147483648
    %v91 = vor.u32 1.1754944e-38, %v90
    %v92 = vsel %vm89, %v91, %v87
    %v93 = vmul.f32 %v28, %v92
    %v94 = vld [vmem:[%s2] sm:$0xff]
    %v95 = vld [vmem:[%s2 + $0x8] sm:$0xff]
    %97 = vset.pattern.permute.xlu0 0
    %98 = vperm.xlu0 %97, %v94
    %v99 = vpop.permute.xlu0 %98
    %102 = vset.pattern.permute.xlu0 0
    %103 = vperm.xlu0 %102, %v95
    %v104 = vpop.permute.xlu0 %103
    %v106 = vmul.f32 %v78, %v99
    %v107 = vmul.f32 %v93, %v104
    %v108 = vld [vmem:[#allocation2] sm:$0xff]
    %v109 = vld [vmem:[#allocation2 + $0x8] sm:$0xff]
    %v110 = vld [vmem:[#allocation2 + $0x10] sm:$0xff]
    %v111 = vld [vmem:[#allocation2 + $0x18] sm:$0xff]
    %v112 = vld [vmem:[%s1] sm:$0xff]
    %v113 = vld [vmem:[%s1 + $0x8] sm:$0xff]
    %114 = vxpose.xlu0.b32.start [1/16] %v106, 128
    %115 = vxpose.xlu0.b32.cont [2/16] %v107, 128
    %116 = vxpose.xlu0.b32.cont [3/16] 0.0, 128
    %117 = vxpose.xlu0.b32.cont [4/16] 0.0, 128
    %118 = vxpose.xlu0.b32.cont [5/16] 0.0, 128
    %119 = vxpose.xlu0.b32.cont [6/16] 0.0, 128
    %120 = vxpose.xlu0.b32.cont [7/16] 0.0, 128
    %121 = vxpose.xlu0.b32.cont [8/16] 0.0, 128
    %122 = vxpose.xlu0.b32.cont [9/16] 0.0, 128
    %123 = vxpose.xlu0.b32.cont [10/16] 0.0, 128
    %124 = vxpose.xlu0.b32.cont [11/16] 0.0, 128
    %125 = vxpose.xlu0.b32.cont [12/16] 0.0, 128
    %126 = vxpose.xlu0.b32.cont [13/16] 0.0, 128
    %127 = vxpose.xlu0.b32.cont [14/16] 0.0, 128
    %128 = vxpose.xlu0.b32.cont [15/16] 0.0, 128
    %129 = vxpose.xlu0.b32.end [16/16] 0.0, 128
    %v130 = vpop.trf.xlu0
    %v131 = vpop.trf.xlu0
    %v132 = vpop.trf.xlu0
    %v133 = vpop.trf.xlu0
    %v134 = vpop.trf.xlu0
    %v135 = vpop.trf.xlu0
    %v136 = vpop.trf.xlu0
    %v137 = vpop.trf.xlu0
    %v138 = vpop.trf.xlu0
    %v139 = vpop.trf.xlu0
    %v140 = vpop.trf.xlu0
    %v141 = vpop.trf.xlu0
    %v142 = vpop.trf.xlu0
    %v143 = vpop.trf.xlu0
    %v144 = vpop.trf.xlu0
    %v145 = vpop.trf.xlu0
    %vm146 = vcmask 130048
    %v148 = vsel %vm146, %v130, 0
    %v151 = vsel %vm146, %v131, 0
    %v154 = vsel %vm146, %v132, 0
    %v157 = vsel %vm146, %v133, 0
    %159 = vmatpush.msra.mxu0 0.0
    %160 = vmatpush.msra.mxu0 0.0
    %161 = vmatpush.msra.mxu0 0.0
    %162 = vmatpush.msra.mxu0 0.0
    %163 = vmatpush.msra.mxu0 0.0
    %164 = vmatpush.msra.mxu0 0.0
    %165 = vmatpush.msra.mxu0 0.0
    %166 = vmatpush.msra.mxu0 0.0
    %167 = vmatpush.msra.mxu0 0.0
    %168 = vmatpush.msra.mxu0 0.0
    %169 = vmatpush.msra.mxu0 0.0
    %170 = vmatpush.msra.mxu0 0.0
    %171 = vmatpush.msra.mxu0 0.0
    %172 = vmatpush.msra.mxu0 0.0
    %173 = vmatpush.msra.mxu0 %v113
    %174 = vmatpush.msra.mxu0 %v112
    %175 = vmatmul.f32.gmra.mxu0 %v148
    %v176 = vpop.f32.mrf.mxu0
    %v177 = vadd.f32 0.0, %v176
    %178 = vmatmul.f32.gmra.mxu0 %v151
    %v179 = vpop.f32.mrf.mxu0
    %v180 = vadd.f32 0.0, %v179
    %181 = vmatmul.f32.gmra.mxu0 %v154
    %v182 = vpop.f32.mrf.mxu0
    %v183 = vadd.f32 0.0, %v182
    %184 = vmatmul.f32.gmra.mxu0 %v157
    %v185 = vpop.f32.mrf.mxu0
    %v186 = vadd.f32 0.0, %v185
    %187 = vdwg.mxu0
    %v188 = vadd.f32 %v108, %v177
    %v189 = vadd.f32 %v109, %v180
    %v190 = vadd.f32 %v110, %v183
    %v191 = vadd.f32 %v111, %v186
    %vm192 = vcmask 64512
    %193 = vst.msk [vmem:[#allocation2] sm:$0xff] %vm192, %v188
    %194 = vst.msk [vmem:[#allocation2 + $0x8] sm:$0xff] %vm192, %v189
    %195 = vst.msk [vmem:[#allocation2 + $0x10] sm:$0xff] %vm192, %v190
    %196 = vst.msk [vmem:[#allocation2 + $0x18] sm:$0xff] %vm192, %v191
    // Predicated region
    $region22: #{t3a_forward.3} parent=1 // pred_check
      %p197 = pneg %p18
    $region23: #{t3a_forward.3} parent=1 // pred_check_branch
      %199 = sbr.rel (%p197) target = $region25
    $region24: #{t3a_forward.3} parent=1 // pred_region
      %v200 = vld [vmem:[#allocation2] sm:$0xff]
      %v201 = vld [vmem:[#allocation2 + $0x8] sm:$0xff]
      %v202 = vld [vmem:[#allocation2 + $0x10] sm:$0xff]
      %v203 = vld [vmem:[#allocation2 + $0x18] sm:$0xff]
      %v204 = vmul.f32 %v200, %v200
      %v205 = vmul.f32 %v201, %v201
      %v206 = vmul.f32 %v202, %v202
      %v207 = vmul.f32 %v203, %v203
      %v208 = vsel %vm192, %v204, 0.0
      %v209 = vsel %vm192, %v205, 0.0
      %v210 = vadd.f32 %v208, %v209
      %v211 = vsel %vm192, %v206, 0.0
      %v212 = vadd.f32 %v210, %v211
      %v213 = vsel %vm192, %v207, 0.0
      %v214 = vadd.f32 %v212, %v213
      %v215 = vrot.slane %v214, 4
      %v216 = vadd.f32 %v214, %v215
      %v217 = vrot.slane %v216, 2
      %v218 = vadd.f32 %v216, %v217
      %v219 = vrot.slane %v218, 1
      %v220 = vadd.f32 %v218, %v219
      %v221 = vrsqrt.pop %v220
      %v222 = vmul.f32 %v221, %v220
      %v223 = vmul.f32 %v222, %v221
      %v224 = vmul.f32 0.5, %v223
      %v225 = vsub.f32 1.5, %v224
      %v226 = vmul.f32 %v221, %v225
      %v227 = vmul.f32 %v220, %v226
      %vm228 = vcmp.eq.f32.partialorder %v220, inf
      %v229 = vsel %vm228, %v220, %v227
      %vm230 = vcmp.eq.f32.partialorder %v220, 0.0
      %v231 = vand.u32 %v220, 2147483648
      %v232 = vsel %vm230, %v231, %v229
      %v233 = vmax.f32 %v232, 1e-12
      %v234 = vrcp.pop %v233
      %v235 = vmul.f32 %v233, %v234
      %v236 = vsub.f32 1.0, %v235
      %v237 = vmul.f32 %v234, %v236
      %v238 = vadd.f32 %v234, %v237
      %vm239 = vweird.f32 %v233
      %vm240 = vweird.f32 %v234
      %vm241 = vmor %vm239, %vm240
      %v242 = vsel %vm241, %v234, %v238
      %v243 = vand.u32 2147483647, %v233
      %vm244 = vcmp.eq.f32.partialorder %v243, 8.507059e+37
      %v245 = vand.u32 %v233, 2147483648
      %v246 = vor.u32 1.1754944e-38, %v245
      %v247 = vsel %vm244, %v246, %v242
      %v248 = vmul.f32 %v200, %v247
      %v249 = vmul.f32 %v201, %v247
      %v250 = vmul.f32 %v202, %v247
      %v251 = vmul.f32 %v203, %v247
      %v252 = vld [vmem:[%s3] sm:$0x3]
      %v254 = vsel %vm31, %v252, 0
      %256 = vmatpush.msra.mxu0 0.0
      %257 = vmatpush.msra.mxu0 0.0
      %258 = vmatpush.msra.mxu0 0.0
      %259 = vmatpush.msra.mxu0 0.0
      %260 = vmatpush.msra.mxu0 0.0
      %261 = vmatpush.msra.mxu0 0.0
      %262 = vmatpush.msra.mxu0 0.0
      %263 = vmatpush.msra.mxu0 0.0
      %264 = vmatpush.msra.mxu0 0.0
      %265 = vmatpush.msra.mxu0 0.0
      %266 = vmatpush.msra.mxu0 0.0
      %267 = vmatpush.msra.mxu0 0.0
      %268 = vmatpush.msra.mxu0 %v251
      %269 = vmatpush.msra.mxu0 %v250
      %270 = vmatpush.msra.mxu0 %v249
      %271 = vmatpush.msra.mxu0 %v248
      %272 = vmatmul.f32.gmra.mxu0 %v254
      %v273 = vpop.f32.mrf.mxu0
      %v274 = vadd.f32 0.0, %v273
      %275 = vdwg.mxu0
      %vm276 = vcmask 58368
      %277 = vst.msk [vmem:[#allocation3] sm:$0x3] %vm276, %v274
    $region25: #{t3a_forward.3} parent=1 // pred_fallthru
      _
    // Predicated region
    $region26: #{t3a_forward.3} parent=1 // pred_check
      _
    $region27: #{t3a_forward.3} parent=1 // pred_check_branch
      %279 = sbr.rel (0) target = $region29
    $region28: #{t3a_forward.3} parent=1 // pred_region
      %281 = vsyncadd [#allocation4], 0
      %s283 = sshll.u32 [#allocation3], 4
      %s284 = int_to_ptr.vmem [resolvable:$true] %s283
      %s285 = sshll.u32 %s4, 4
      %s286 = int_to_ptr.hbm [resolvable:$true] %s285
      %288 = dma.vmem_to_hbm [thread:$0]  %s284, 32, %s286, [#allocation4]
    $region29: #{t3a_forward.3} parent=1 // pred_fallthru
      _
    // Predicated region
    $region30: #{t3a_forward.3} parent=1 // pred_check
      _
    $region31: #{t3a_forward.3} parent=1 // pred_check_branch
      %290 = sbr.rel (0) target = $region33
    $region32: #{t3a_forward.3} parent=1 // pred_region
      %292 = dma.done [#allocation4], 32
    $region33: #{t3a_forward.3} parent=1 // pred_fallthru
      _
    %293 = vsyncpa [#allocation4], 1

// kernel: t3a_forward.2
$region0: #{t3a_forward.2}
  #allocation0 [shape = 'u32[]', space=smem, size = 0x4, offset = 0x4, fixed_abs, tag = 'smem constant byte address 0x4 - core index']
  #allocation1 [shape = 'u32[72,128]{1,0:T(1,128)}', space=vmem, size = 0x9000, scoped, tag = 'internal scratch']
  %s0 = inlined_call_operand.vmem [shape: bf16[8,4,256], index: 0, kind: input, shape index: {}]
  %s1 = inlined_call_operand.vmem [shape: bf16[32,4], index: 1, kind: input, shape index: {}]
  %s2 = inlined_call_operand.vmem [shape: f32[32,8], index: 2, kind: input, shape index: {}]
  %s3 = inlined_call_operand.vmem [shape: f32[8,32], index: 3, kind: output, shape index: {0}]
  %s4 = inlined_call_operand.vmem [shape: f32[8,128], index: 4, kind: output, shape index: {1}]
  %5 = xla_tuple %s3, %s4
  %s6 = sld [smem:[#allocation0]]
  $region102: #{t3a_forward.2} parent=0
    _
  %s8 = ssub.s32 1, %s6
  %s9 = scalar_select 0, %s8, %s6
  $region1: #{t3a_forward.2} parent=0
    #allocation2 [shape = 'u8[16384]{0}', space=vmem, size = 0x4000, scoped, tag = 'input window, operand 0']
    loop: start=0, step=1, limit=4
    $region2: #{t3a_forward.2} parent=1 // loop_pre_header
      _
    $region3: #{t3a_forward.2} parent=1 // loop_header
      %s11 = sphi 0, %s15
      %p12 = scmp.ge.s32.totalorder %s11, 4
      %s18 = sphi 0, %s30
      %s19 = sphi 0, %s26
      %s20 = sphi 0, %s18
      %s21 = sphi 0, %s19
      %s22 = sphi 0, %s20
      %s23 = sphi 0, %s21
      %s35 = sphi 0, %s37
      %s38 = sphi 0, %s35
      %s39 = sphi 0, %s38
      %s55 = sphi 0, %s39
      %s59 = sphi 0, %s59
      %s61 = sphi 0, %s59
      %s62 = sphi 0, %s61
      %s76 = sphi 0, %s62
      %s80 = sphi 0, %s80
      %s82 = sphi 0, %s80
      %s83 = sphi 0, %s82
      %s97 = sphi 0, %s83
      %s103 = sphi 0, %s105
      %s106 = sphi 0, %s103
      %s107 = sphi 0, %s106
      %s123 = sphi 0, %s107
      %s129 = sphi 0, %s131
      %s132 = sphi 0, %s129
      %s133 = sphi 0, %s132
      %s149 = sphi 0, %s133
    $region4: #{t3a_forward.2} parent=1 // loop_header_branch
      %14 = sbr.rel (%p12) target = $region8
    $region5: #{t3a_forward.2} parent=1 // loop_body
      %s16 = ssub.s32 %s11, 1
      %s17 = ssub.s32 %s11, 2
      %s24 = sadd.s32 1, %s19
      %p25 = scmp.ge.s32.totalorder %s24, 2
      %s26 = scalar_select %p25, 0, %s24
      %s27 = sadd.s32 1, %s18
      %s28 = scalar_select %p25, %s27, %s18
      %p29 = scmp.ge.s32.totalorder %s28, 1
      %s30 = scalar_select %p29, 0, %s28
      %s31 = ssub.s32 %s18, %s30
      %s32 = ssub.s32 %s19, %s26
      %s33 = sor.u32 %s31, %s32
      %p34 = scmp.eq.s32.totalorder %s33, 0
      %s36 = sadd.s32 %s35, 1
      %s37 = scalar_select %p34, %s35, %s36
      %p40 = pneg %p34
      %p41 = scmp.eq.s32.totalorder %s11, 1
      %p42 = por %p40, %p41
      %p43 = scmp.ne.s32.totalorder %s35, %s38
      %p44 = scmp.eq.s32.totalorder %s11, 0
      %p45 = por %p43, %p44
      %p46 = scmp.ne.s32.totalorder %s35, %s38
      %p47 = scmp.eq.s32.totalorder %s16, 1
      %p48 = por %p46, %p47
      %p49 = scmp.ne.s32.totalorder %s38, %s39
      %p50 = scmp.eq.s32.totalorder %s16, 0
      %p51 = por %p49, %p50
      %p52 = scmp.ne.s32.totalorder %s38, %s39
      %p53 = scmp.eq.s32.totalorder %s17, 1
      %p54 = por %p52, %p53
      %p56 = scmp.ne.s32.totalorder %s39, %s55
      %p57 = scmp.eq.s32.totalorder %s17, 0
      %p58 = por %p56, %p57
      %s60 = sadd.s32 %s59, 1
      %p63 = scmp.eq.s32.totalorder %s11, 1
      %p64 = scmp.ne.s32.totalorder %s59, %s61
      %p65 = scmp.eq.s32.totalorder %s11, 0
      %p66 = por %p64, %p65
      %p67 = scmp.ne.s32.totalorder %s59, %s61
      %p68 = scmp.eq.s32.totalorder %s16, 1
      %p69 = por %p67, %p68
      %p70 = scmp.ne.s32.totalorder %s61, %s62
      %p71 = scmp.eq.s32.totalorder %s16, 0
      %p72 = por %p70, %p71
      %p73 = scmp.ne.s32.totalorder %s61, %s62
      %p74 = scmp.eq.s32.totalorder %s17, 1
      %p75 = por %p73, %p74
      %p77 = scmp.ne.s32.totalorder %s62, %s76
      %p78 = scmp.eq.s32.totalorder %s17, 0
      %p79 = por %p77, %p78
      %s81 = sadd.s32 %s80, 1
      %p84 = scmp.eq.s32.totalorder %s11, 1
      %p85 = scmp.ne.s32.totalorder %s80, %s82
      %p86 = scmp.eq.s32.totalorder %s11, 0
      %p87 = por %p85, %p86
      %p88 = scmp.ne.s32.totalorder %s80, %s82
      %p89 = scmp.eq.s32.totalorder %s16, 1
      %p90 = por %p88, %p89
      %p91 = scmp.ne.s32.totalorder %s82, %s83
      %p92 = scmp.eq.s32.totalorder %s16, 0
      %p93 = por %p91, %p92
      %p94 = scmp.ne.s32.totalorder %s82, %s83
      %p95 = scmp.eq.s32.totalorder %s17, 1
      %p96 = por %p94, %p95
      %p98 = scmp.ne.s32.totalorder %s83, %s97
      %p99 = scmp.eq.s32.totalorder %s17, 0
      %p100 = por %p98, %p99
      %s101 = ssub.s32 %s18, %s30
      %p102 = scmp.eq.s32.totalorder %s101, 0
      %s104 = sadd.s32 %s103, 1
      %s105 = scalar_select %p102, %s103, %s104
      %p108 = pneg %p102
      %p109 = scmp.eq.s32.totalorder %s11, 1
      %p110 = por %p108, %p109
      %p111 = scmp.ne.s32.totalorder %s103, %s106
      %p112 = scmp.eq.s32.totalorder %s11, 0
      %p113 = por %p111, %p112
      %p114 = scmp.ne.s32.totalorder %s103, %s106
      %p115 = scmp.eq.s32.totalorder %s16, 1
      %p116 = por %p114, %p115
      %p117 = scmp.ne.s32.totalorder %s106, %s107
      %p118 = scmp.eq.s32.totalorder %s16, 0
      %p119 = por %p117, %p118
      %p120 = scmp.ne.s32.totalorder %s106, %s107
      %p121 = scmp.eq.s32.totalorder %s17, 1
      %p122 = por %p120, %p121
      %p124 = scmp.ne.s32.totalorder %s107, %s123
      %p125 = scmp.eq.s32.totalorder %s17, 0
      %p126 = por %p124, %p125
      %s127 = ssub.s32 %s18, %s30
      %p128 = scmp.eq.s32.totalorder %s127, 0
      %s130 = sadd.s32 %s129, 1
      %s131 = scalar_select %p128, %s129, %s130
      %p134 = pneg %p128
      %p135 = scmp.eq.s32.totalorder %s11, 1
      %p136 = por %p134, %p135
      %p137 = scmp.ne.s32.totalorder %s129, %s132
      %p138 = scmp.eq.s32.totalorder %s11, 0
      %p139 = por %p137, %p138
      %p140 = scmp.ne.s32.totalorder %s129, %s132
      %p141 = scmp.eq.s32.totalorder %s16, 1
      %p142 = por %p140, %p141
      %p143 = scmp.ne.s32.totalorder %s132, %s133
      %p144 = scmp.eq.s32.totalorder %s16, 0
      %p145 = por %p143, %p144
      %p146 = scmp.ne.s32.totalorder %s132, %s133
      %p147 = scmp.eq.s32.totalorder %s17, 1
      %p148 = por %p146, %p147
      %p150 = scmp.ne.s32.totalorder %s133, %s149
      %p151 = scmp.eq.s32.totalorder %s17, 0
      %p152 = por %p150, %p151
      %p153 = scmp.le.s32.totalorder 1, %s11
      %p154 = scmp.lt.s32.totalorder %s11, 3
      %p155 = pnand %p153, %p154
      %p156 = pneg %p155
      // Predicated region
      $region9: #{t3a_forward.2} parent=5 // pred_check
        _
      $region10: #{t3a_forward.2} parent=5 // pred_check_branch
        %158 = sbr.rel (%p155) target = $region12
      $region11: #{t3a_forward.2} parent=5 // pred_region
        %s159 = ssub.s32 %s11, 1
        // Predicated region
        $region13: #{t3a_forward.2} parent=11 // pred_check
          %p160 = pneg %p72
        $region14: #{t3a_forward.2} parent=11 // pred_check_branch
          %162 = sbr.rel (%p160) target = $region16
        $region15: #{t3a_forward.2} parent=11 // pred_region
          _
        $region16: #{t3a_forward.2} parent=11 // pred_fallthru
          _
        // Predicated region
        $region17: #{t3a_forward.2} parent=11 // pred_check
          %p163 = pneg %p93
        $region18: #{t3a_forward.2} parent=11 // pred_check_branch
          %165 = sbr.rel (%p163) target = $region20
        $region19: #{t3a_forward.2} parent=11 // pred_region
          _
        $region20: #{t3a_forward.2} parent=11 // pred_fallthru
          _
      $region12: #{t3a_forward.2} parent=5 // pred_fallthru
        _
      %p166 = scmp.lt.s32.totalorder %s11, 2
      // Predicated region
      $region21: #{t3a_forward.2} parent=5 // pred_check
        %p167 = pneg %p166
      $region22: #{t3a_forward.2} parent=5 // pred_check_branch
        %169 = sbr.rel (%p167) target = $region24
      $region23: #{t3a_forward.2} parent=5 // pred_region
        // Predicated region
        $region25: #{t3a_forward.2} parent=23 // pred_check
          %p170 = pneg %p45
        $region26: #{t3a_forward.2} parent=23 // pred_check_branch
          %172 = sbr.rel (%p170) target = $region28
        $region27: #{t3a_forward.2} parent=23 // pred_region
          %s173 = sand.u32 %s35, 1
          %s174 = sand.u32 %s35, 1
          %s175 = smul.addr %s174, 16
          %s176 = scalar_lea.vmem [#allocation2], %s175
          %s177 = smul.u32 8, %s18
          %s178 = smul.addr %s177, 2
          %s179 = sadd.s32 %s19, %s178
          %s180 = smul.addr %s179, 2
          %s181 = scalar_lea.vmem %s0, %s180
          // Predicated region
          $region29: #{t3a_forward.2} parent=27 // pred_check
            _
          $region30: #{t3a_forward.2} parent=27 // pred_check_branch
            %183 = sbr.rel (0) target = $region32
          $region31: #{t3a_forward.2} parent=27 // pred_region
            // Predicated region
            $region33: #{t3a_forward.2} parent=31 // pred_check
              _
            $region34: #{t3a_forward.2} parent=31 // pred_check_branch
              %185 = sbr.rel target = $region36
            $region35: #{t3a_forward.2} parent=31 // pred_region
              // Predicated region
              $region48: #{t3a_forward.2} parent=35 // pred_check
                _
              $region49: #{t3a_forward.2} parent=35 // pred_check_branch
                %215 = sbr.rel (0) target = $region51
              $region50: #{t3a_forward.2} parent=35 // pred_region
                loop: start=0, step=1, limit=1
                $region52: #{t3a_forward.2} parent=50 // loop_pre_header
                  _
                $region53: #{t3a_forward.2} parent=50 // loop_header
                  %s217 = sphi 0, %s221
                  %p218 = scmp.ge.s32.totalorder %s217, 1
                  %s222 = sphi %s181, %s181
                  %s223 = sphi %s176, %s176
                $region54: #{t3a_forward.2} parent=50 // loop_header_branch
                  %220 = sbr.rel (%p218) target = $region58
                $region55: #{t3a_forward.2} parent=50 // loop_body
                  _
                $region56: #{t3a_forward.2} parent=50 // loop_footer
                  %s221 = sadd.s32 1, %s217
                $region57: #{t3a_forward.2} parent=50 // loop_footer_branch
                  %216 = sbr.rel target = $region53
                $region58: #{t3a_forward.2} parent=50 // loop_exit
                  _
                %s225 = ssub.s32 4, 1
                loop: start=0, step=1, limit=1
                $region59: #{t3a_forward.2} parent=50 // loop_pre_header
                  _
                $region60: #{t3a_forward.2} parent=50 // loop_header
                  %s227 = sphi 0, %s231
                  %p228 = scmp.ge.s32.totalorder %s227, 1
                  %s232 = sphi %s181, %s181
                  %s233 = sphi %s176, %s176
                $region61: #{t3a_forward.2} parent=50 // loop_header_branch
                  %230 = sbr.rel (%p228) target = $region65
                $region62: #{t3a_forward.2} parent=50 // loop_body
                  %v234 = vld [vmem:[%s232] sm:%s225]
                  %235 = vst [vmem:[%s233] sm:%s225] %v234
                  %v236 = vld [vmem:[%s232 + $0x4] sm:%s225]
                  %237 = vst [vmem:[%s233 + $0x2] sm:%s225] %v236
                  %v238 = vld [vmem:[%s232 + $0x8] sm:%s225]
                  %239 = vst [vmem:[%s233 + $0x4] sm:%s225] %v238
                  %v240 = vld [vmem:[%s232 + $0xc] sm:%s225]
                  %241 = vst [vmem:[%s233 + $0x6] sm:%s225] %v240
                  %v242 = vld [vmem:[%s232 + $0x10] sm:%s225]
                  %243 = vst [vmem:[%s233 + $0x8] sm:%s225] %v242
                  %v244 = vld [vmem:[%s232 + $0x14] sm:%s225]
                  %245 = vst [vmem:[%s233 + $0xa] sm:%s225] %v244
                  %v246 = vld [vmem:[%s232 + $0x18] sm:%s225]
                  %247 = vst [vmem:[%s233 + $0xc] sm:%s225] %v246
                  %v248 = vld [vmem:[%s232 + $0x1c] sm:%s225]
                  %249 = vst [vmem:[%s233 + $0xe] sm:%s225] %v248
                $region63: #{t3a_forward.2} parent=50 // loop_footer
                  %s231 = sadd.s32 1, %s227
                $region64: #{t3a_forward.2} parent=50 // loop_footer_branch
                  %226 = sbr.rel target = $region60
                $region65: #{t3a_forward.2} parent=50 // loop_exit
                  _
              $region51: #{t3a_forward.2} parent=35 // pred_fallthru
                _
            $region36: #{t3a_forward.2} parent=31 // pred_fallthru
              _
            // Predicated region
            $region37: #{t3a_forward.2} parent=31 // pred_check
              _
            $region38: #{t3a_forward.2} parent=31 // pred_check_branch
              %187 = sbr.rel (0) target = $region40
            $region39: #{t3a_forward.2} parent=31 // pred_region
              %s189 = ssub.s32 4, 1
              loop: start=0, step=1, limit=1
              $region41: #{t3a_forward.2} parent=39 // loop_pre_header
                _
              $region42: #{t3a_forward.2} parent=39 // loop_header
                %s191 = sphi 0, %s195
                %p192 = scmp.ge.s32.totalorder %s191, 1
                %s196 = sphi %s181, %s181
                %s197 = sphi %s176, %s176
              $region43: #{t3a_forward.2} parent=39 // loop_header_branch
                %194 = sbr.rel (%p192) target = $region47
              $region44: #{t3a_forward.2} parent=39 // loop_body
                %v198 = vld [vmem:[%s196] sm:%s189]
                %199 = vst [vmem:[%s197] sm:%s189] %v198
                %v200 = vld [vmem:[%s196 + $0x4] sm:%s189]
                %201 = vst [vmem:[%s197 + $0x2] sm:%s189] %v200
                %v202 = vld [vmem:[%s196 + $0x8] sm:%s189]
                %203 = vst [vmem:[%s197 + $0x4] sm:%s189] %v202
                %v204 = vld [vmem:[%s196 + $0xc] sm:%s189]
                %205 = vst [vmem:[%s197 + $0x6] sm:%s189] %v204
                %v206 = vld [vmem:[%s196 + $0x10] sm:%s189]
                %207 = vst [vmem:[%s197 + $0x8] sm:%s189] %v206
                %v208 = vld [vmem:[%s196 + $0x14] sm:%s189]
                %209 = vst [vmem:[%s197 + $0xa] sm:%s189] %v208
                %v210 = vld [vmem:[%s196 + $0x18] sm:%s189]
                %211 = vst [vmem:[%s197 + $0xc] sm:%s189] %v210
                %v212 = vld [vmem:[%s196 + $0x1c] sm:%s189]
                %213 = vst [vmem:[%s197 + $0xe] sm:%s189] %v212
              $region45: #{t3a_forward.2} parent=39 // loop_footer
                %s195 = sadd.s32 1, %s191
              $region46: #{t3a_forward.2} parent=39 // loop_footer_branch
                %190 = sbr.rel target = $region42
              $region47: #{t3a_forward.2} parent=39 // loop_exit
                _
            $region40: #{t3a_forward.2} parent=31 // pred_fallthru
              _
          $region32: #{t3a_forward.2} parent=27 // pred_fallthru
            _
          %250 = vnop
        $region28: #{t3a_forward.2} parent=23 // pred_fallthru
          _
      $region24: #{t3a_forward.2} parent=5 // pred_fallthru
        _
      %p251 = scmp.le.s32.totalorder 1, %s11
      %p252 = scmp.lt.s32.totalorder %s11, 3
      %p253 = pnand %p251, %p252
      %p254 = pneg %p253
      // Predicated region
      $region66: #{t3a_forward.2} parent=5 // pred_check
        _
      $region67: #{t3a_forward.2} parent=5 // pred_check_branch
        %256 = sbr.rel (%p253) target = $region69
      $region68: #{t3a_forward.2} parent=5 // pred_region
        %s257 = ssub.s32 %s11, 1
        %s258 = sand.u32 %s38, 1
        %s259 = sand.u32 %s38, 1
        %s260 = smul.addr %s259, 16
        %s261 = scalar_lea.vmem [#allocation2], %s260
        // Predicated region
        $region70: #{t3a_forward.2} parent=68 // pred_check
          %p262 = pneg %p51
        $region71: #{t3a_forward.2} parent=68 // pred_check_branch
          %264 = sbr.rel (%p262) target = $region73
        $region72: #{t3a_forward.2} parent=68 // pred_region
          _
        $region73: #{t3a_forward.2} parent=68 // pred_fallthru
          _
        %s265 = sand.u32 %s38, 1
        %s266 = sand.u32 %s38, 1
        %s267 = smul.addr %s266, 16
        %s268 = scalar_lea.vmem [#allocation2], %s267
        %p269 = pneg %p51
        %p270 = pneg %p48
        %p271 = pneg %p72
        %p272 = pneg %p69
        %p273 = pneg %p93
        %p274 = pneg %p90
        %p275 = pneg %p119
        %p276 = pneg %p116
        %p277 = scmp.lt.s32.totalorder %s20, 0
        %s278 = scalar_select %p277, %s20, 0
        %s279 = smul.addr %s278, 8
        %s280 = scalar_lea.vmem %s3, %s279
        %p281 = pneg %p145
        %p282 = pneg %p142
        %p283 = scmp.lt.s32.totalorder %s20, 0
        %s284 = scalar_select %p283, %s20, 0
        %s285 = smul.addr %s284, 8
        %s286 = scalar_lea.vmem %s4, %s285
        %s287 = smul.u32 8, %s20
        %p288 = scmp.lt.s32.totalorder %s20, 0
        %s289 = scalar_select %p288, %s20, 0
        %s290 = smul.addr %s289, 8
        %s291 = scalar_lea.vmem %s3, %s290
        %p292 = scmp.lt.s32.totalorder %s20, 0
        %s293 = scalar_select %p292, %s20, 0
        %s294 = smul.addr %s293, 8
        %s295 = scalar_lea.vmem %s4, %s294
        %p297 = scmp.eq.s32.totalorder %s21, 0
        // Predicated region
        $region74: #{t3a_forward.2} parent=68 // pred_check
          %p298 = pneg %p297
        $region75: #{t3a_forward.2} parent=68 // pred_check_branch
          %300 = sbr.rel (%p298) target = $region77
        $region76: #{t3a_forward.2} parent=68 // pred_region
          %vm301 = vcmask 261120
          %302 = vst.msk [vmem:[%s291] sm:$0xff] %vm301, 0.0
        $region77: #{t3a_forward.2} parent=68 // pred_fallthru
          _
        %v303 = vld [vmem:[%s1] sm:$0xf]
        %v304 = vld [vmem:[%s1 + $0x4] sm:$0xf]
        %v305 = vld [vmem:[%s1 + $0x8] sm:$0xf]
        %v306 = vld [vmem:[%s1 + $0xc] sm:$0xf]
        %v307 = vlaneseq
        %v308 = vshrl.u32 %v307, 7
        %v309 = vld [vmem:[%s261] sm:$0x3]
        %v314 = vunpack.c.l.b16 %v303
        %v315 = vunpack.c.l.b16 %v304
        %v316 = vunpack.c.l.b16 %v305
        %v317 = vunpack.c.l.b16 %v306
        %v318 = vpack.c.b16 %v315, %v314
        %v319 = vpack.c.b16 %v317, %v316
        %vm320 = vcmask 31744
        %v322 = vsel %vm320, %v318, 0
        %v325 = vsel %vm320, %v319, 0
        %vm327 = vcmask 1041408
        %v329 = vsel %vm327, %v309, 0
        %331 = vmatpush.bf16.msra.mxu0 0
        %332 = vmatpush.bf16.msra.mxu0 0
        %333 = vmatpush.bf16.msra.mxu0 0
        %334 = vmatpush.bf16.msra.mxu0 0
        %335 = vmatpush.bf16.msra.mxu0 0
        %336 = vmatpush.bf16.msra.mxu0 0
        %337 = vmatpush.bf16.msra.mxu0 0
        %338 = vmatpush.bf16.msra.mxu0 %v329
        %339 = vmatmul.bf16.gmra.mxu0 %v322
        %v340 = vpop.f32.mrf.mxu0
        %v341 = vadd.f32 0.0, %v340
        %v342 = vpop.f32.mrf.mxu0
        %v343 = vadd.f32 0.0, %v342
        %344 = vmatmul.bf16.gmra.mxu0 %v325
        %v345 = vpop.f32.mrf.mxu0
        %v346 = vadd.f32 0.0, %v345
        %v347 = vpop.f32.mrf.mxu0
        %v348 = vadd.f32 0.0, %v347
        %349 = vdwg.mxu0
        %v350 = vmax.f32 %v341, 0.0
        %v351 = vmax.f32 %v343, 0.0
        %v352 = vmax.f32 %v346, 0.0
        %v353 = vmax.f32 %v348, 0.0
        %354 = vadd.xlane.f32.xlu0 %v350
        %v355 = vpop.xlane.xlu0 %354
        %356 = vadd.xlane.f32.xlu0 %v351
        %v357 = vpop.xlane.xlu0 %356
        %358 = vadd.xlane.f32.xlu0 %v352
        %v359 = vpop.xlane.xlu0 %358
        %360 = vadd.xlane.f32.xlu0 %v353
        %v361 = vpop.xlane.xlu0 %360
        %vm362 = vcmp.eq.s32.totalorder %v308, 0
        %v367 = vlaneseq
        %v368 = vand.u32 %v367, 127
        %v369 = vperm.slane %v355, %v368
        %v370 = vadd.s32 %v368, 4294967288
        %v371 = vperm.slane %v357, %v370
        %vm372 = vcmask 130112
        %v373 = vsel %vm372, %v371, %v369
        %v374 = vadd.s32 %v368, 4294967280
        %v375 = vperm.slane %v359, %v374
        %vm376 = vcmask 195712
        %v377 = vsel %vm376, %v375, %v373
        %v378 = vadd.s32 %v368, 4294967272
        %v379 = vperm.slane %v361, %v378
        %vm380 = vcmask 261312
        %v381 = vsel %vm380, %v379, %v377
        %vm382 = vcmask 1042434
        %v383 = vsel %vm382, %v381, %v381
        %vm384 = vcmask 1043459
        %v385 = vsel %vm384, %v381, %v383
        %vm386 = vcmask 1044484
        %v387 = vsel %vm386, %v381, %v385
        %vm388 = vcmask 1045509
        %v389 = vsel %vm388, %v381, %v387
        %vm390 = vcmask 1046534
        %v391 = vsel %vm390, %v381, %v389
        %vm392 = vcmask 1047559
        %v393 = vsel %vm392, %v381, %v391
        %v395 = vsel %vm362, %v393, 0.0
        %s396 = scalar_lea.vmem %s261, 2 [#allocation2]
        %v397 = vld [vmem:[%s396] sm:$0x3]
        %v399 = vsel %vm327, %v397, 0
        %401 = vmatpush.bf16.msra.mxu0 0
        %402 = vmatpush.bf16.msra.mxu0 0
        %403 = vmatpush.bf16.msra.mxu0 0
        %404 = vmatpush.bf16.msra.mxu0 0
        %405 = vmatpush.bf16.msra.mxu0 0
        %406 = vmatpush.bf16.msra.mxu0 0
        %407 = vmatpush.bf16.msra.mxu0 0
        %408 = vmatpush.bf16.msra.mxu0 %v399
        %409 = vmatmul.bf16.gmra.mxu0 %v322
        %v410 = vpop.f32.mrf.mxu0
        %v411 = vadd.f32 0.0, %v410
        %v412 = vpop.f32.mrf.mxu0
        %v413 = vadd.f32 0.0, %v412
        %414 = vmatmul.bf16.gmra.mxu0 %v325
        %v415 = vpop.f32.mrf.mxu0
        %v416 = vadd.f32 0.0, %v415
        %v417 = vpop.f32.mrf.mxu0
        %v418 = vadd.f32 0.0, %v417
        %419 = vdwg.mxu0
        %v420 = vmax.f32 %v411, 0.0
        %v421 = vmax.f32 %v413, 0.0
        %v422 = vmax.f32 %v416, 0.0
        %v423 = vmax.f32 %v418, 0.0
        %424 = vadd.xlane.f32.xlu0 %v420
        %v425 = vpop.xlane.xlu0 %424
        %426 = vadd.xlane.f32.xlu0 %v421
        %v427 = vpop.xlane.xlu0 %426
        %428 = vadd.xlane.f32.xlu0 %v422
        %v429 = vpop.xlane.xlu0 %428
        %430 = vadd.xlane.f32.xlu0 %v423
        %v431 = vpop.xlane.xlu0 %430
        %vm432 = vcmp.eq.s32.totalorder %v308, 1
        %v437 = vperm.slane %v425, %v368
        %v438 = vperm.slane %v427, %v370
        %v439 = vsel %vm372, %v438, %v437
        %v440 = vperm.slane %v429, %v374
        %v441 = vsel %vm376, %v440, %v439
        %v442 = vperm.slane %v431, %v378
        %v443 = vsel %vm380, %v442, %v441
        %v444 = vsel %vm382, %v443, %v443
        %v445 = vsel %vm384, %v443, %v444
        %v446 = vsel %vm386, %v443, %v445
        %v447 = vsel %vm388, %v443, %v446
        %v448 = vsel %vm390, %v443, %v447
        %v449 = vsel %vm392, %v443, %v448
        %v451 = vsel %vm432, %v449, %v395
        %s452 = scalar_lea.vmem %s261, 4 [#allocation2]
        %v453 = vld [vmem:[%s452] sm:$0x3]
        %v455 = vsel %vm327, %v453, 0
        %457 = vmatpush.bf16.msra.mxu0 0
        %458 = vmatpush.bf16.msra.mxu0 0
        %459 = vmatpush.bf16.msra.mxu0 0
        %460 = vmatpush.bf16.msra.mxu0 0
        %461 = vmatpush.bf16.msra.mxu0 0
        %462 = vmatpush.bf16.msra.mxu0 0
        %463 = vmatpush.bf16.msra.mxu0 0
        %464 = vmatpush.bf16.msra.mxu0 %v455
        %465 = vmatmul.bf16.gmra.mxu0 %v322
        %v466 = vpop.f32.mrf.mxu0
        %v467 = vadd.f32 0.0, %v466
        %v468 = vpop.f32.mrf.mxu0
        %v469 = vadd.f32 0.0, %v468
        %470 = vmatmul.bf16.gmra.mxu0 %v325
        %v471 = vpop.f32.mrf.mxu0
        %v472 = vadd.f32 0.0, %v471
        %v473 = vpop.f32.mrf.mxu0
        %v474 = vadd.f32 0.0, %v473
        %475 = vdwg.mxu0
        %v476 = vmax.f32 %v467, 0.0
        %v477 = vmax.f32 %v469, 0.0
        %v478 = vmax.f32 %v472, 0.0
        %v479 = vmax.f32 %v474, 0.0
        %480 = vadd.xlane.f32.xlu0 %v476
        %v481 = vpop.xlane.xlu0 %480
        %482 = vadd.xlane.f32.xlu0 %v477
        %v483 = vpop.xlane.xlu0 %482
        %484 = vadd.xlane.f32.xlu0 %v478
        %v485 = vpop.xlane.xlu0 %484
        %486 = vadd.xlane.f32.xlu0 %v479
        %v487 = vpop.xlane.xlu0 %486
        %vm488 = vcmp.eq.s32.totalorder %v308, 2
        %v493 = vperm.slane %v481, %v368
        %v494 = vperm.slane %v483, %v370
        %v495 = vsel %vm372, %v494, %v493
        %v496 = vperm.slane %v485, %v374
        %v497 = vsel %vm376, %v496, %v495
        %v498 = vperm.slane %v487, %v378
        %v499 = vsel %vm380, %v498, %v497
        %v500 = vsel %vm382, %v499, %v499
        %v501 = vsel %vm384, %v499, %v500
        %v502 = vsel %vm386, %v499, %v501
        %v503 = vsel %vm388, %v499, %v502
        %v504 = vsel %vm390, %v499, %v503
        %v505 = vsel %vm392, %v499, %v504
        %v507 = vsel %vm488, %v505, %v451
        %s508 = scalar_lea.vmem %s261, 6 [#allocation2]
        %v509 = vld [vmem:[%s508] sm:$0x3]
        %v511 = vsel %vm327, %v509, 0
        %513 = vmatpush.bf16.msra.mxu0 0
        %514 = vmatpush.bf16.msra.mxu0 0
        %515 = vmatpush.bf16.msra.mxu0 0
        %516 = vmatpush.bf16.msra.mxu0 0
        %517 = vmatpush.bf16.msra.mxu0 0
        %518 = vmatpush.bf16.msra.mxu0 0
        %519 = vmatpush.bf16.msra.mxu0 0
        %520 = vmatpush.bf16.msra.mxu0 %v511
        %521 = vmatmul.bf16.gmra.mxu0 %v322
        %v522 = vpop.f32.mrf.mxu0
        %v523 = vadd.f32 0.0, %v522
        %v524 = vpop.f32.mrf.mxu0
        %v525 = vadd.f32 0.0, %v524
        %526 = vmatmul.bf16.gmra.mxu0 %v325
        %v527 = vpop.f32.mrf.mxu0
        %v528 = vadd.f32 0.0, %v527
        %v529 = vpop.f32.mrf.mxu0
        %v530 = vadd.f32 0.0, %v529
        %531 = vdwg.mxu0
        %v532 = vmax.f32 %v523, 0.0
        %v533 = vmax.f32 %v525, 0.0
        %v534 = vmax.f32 %v528, 0.0
        %v535 = vmax.f32 %v530, 0.0
        %536 = vadd.xlane.f32.xlu0 %v532
        %v537 = vpop.xlane.xlu0 %536
        %538 = vadd.xlane.f32.xlu0 %v533
        %v539 = vpop.xlane.xlu0 %538
        %540 = vadd.xlane.f32.xlu0 %v534
        %v541 = vpop.xlane.xlu0 %540
        %542 = vadd.xlane.f32.xlu0 %v535
        %v543 = vpop.xlane.xlu0 %542
        %vm544 = vcmp.eq.s32.totalorder %v308, 3
        %v549 = vperm.slane %v537, %v368
        %v550 = vperm.slane %v539, %v370
        %v551 = vsel %vm372, %v550, %v549
        %v552 = vperm.slane %v541, %v374
        %v553 = vsel %vm376, %v552, %v551
        %v554 = vperm.slane %v543, %v378
        %v555 = vsel %vm380, %v554, %v553
        %v556 = vsel %vm382, %v555, %v555
        %v557 = vsel %vm384, %v555, %v556
        %v558 = vsel %vm386, %v555, %v557
        %v559 = vsel %vm388, %v555, %v558
        %v560 = vsel %vm390, %v555, %v559
        %v561 = vsel %vm392, %v555, %v560
        %v563 = vsel %vm544, %v561, %v507
        %s564 = scalar_lea.vmem %s261, 8 [#allocation2]
        %v565 = vld [vmem:[%s564] sm:$0x3]
        %v567 = vsel %vm327, %v565, 0
        %569 = vmatpush.bf16.msra.mxu0 0
        %570 = vmatpush.bf16.msra.mxu0 0
        %571 = vmatpush.bf16.msra.mxu0 0
        %572 = vmatpush.bf16.msra.mxu0 0
        %573 = vmatpush.bf16.msra.mxu0 0
        %574 = vmatpush.bf16.msra.mxu0 0
        %575 = vmatpush.bf16.msra.mxu0 0
        %576 = vmatpush.bf16.msra.mxu0 %v567
        %577 = vmatmul.bf16.gmra.mxu0 %v322
        %v578 = vpop.f32.mrf.mxu0
        %v579 = vadd.f32 0.0, %v578
        %v580 = vpop.f32.mrf.mxu0
        %v581 = vadd.f32 0.0, %v580
        %582 = vmatmul.bf16.gmra.mxu0 %v325
        %v583 = vpop.f32.mrf.mxu0
        %v584 = vadd.f32 0.0, %v583
        %v585 = vpop.f32.mrf.mxu0
        %v586 = vadd.f32 0.0, %v585
        %587 = vdwg.mxu0
        %v588 = vmax.f32 %v579, 0.0
        %v589 = vmax.f32 %v581, 0.0
        %v590 = vmax.f32 %v584, 0.0
        %v591 = vmax.f32 %v586, 0.0
        %592 = vadd.xlane.f32.xlu0 %v588
        %v593 = vpop.xlane.xlu0 %592
        %594 = vadd.xlane.f32.xlu0 %v589
        %v595 = vpop.xlane.xlu0 %594
        %596 = vadd.xlane.f32.xlu0 %v590
        %v597 = vpop.xlane.xlu0 %596
        %598 = vadd.xlane.f32.xlu0 %v591
        %v599 = vpop.xlane.xlu0 %598
        %vm600 = vcmp.eq.s32.totalorder %v308, 4
        %v605 = vperm.slane %v593, %v368
        %v606 = vperm.slane %v595, %v370
        %v607 = vsel %vm372, %v606, %v605
        %v608 = vperm.slane %v597, %v374
        %v609 = vsel %vm376, %v608, %v607
        %v610 = vperm.slane %v599, %v378
        %v611 = vsel %vm380, %v610, %v609
        %v612 = vsel %vm382, %v611, %v611
        %v613 = vsel %vm384, %v611, %v612
        %v614 = vsel %vm386, %v611, %v613
        %v615 = vsel %vm388, %v611, %v614
        %v616 = vsel %vm390, %v611, %v615
        %v617 = vsel %vm392, %v611, %v616
        %v619 = vsel %vm600, %v617, %v563
        %s620 = scalar_lea.vmem %s261, 10 [#allocation2]
        %v621 = vld [vmem:[%s620] sm:$0x3]
        %v623 = vsel %vm327, %v621, 0
        %625 = vmatpush.bf16.msra.mxu0 0
        %626 = vmatpush.bf16.msra.mxu0 0
        %627 = vmatpush.bf16.msra.mxu0 0
        %628 = vmatpush.bf16.msra.mxu0 0
        %629 = vmatpush.bf16.msra.mxu0 0
        %630 = vmatpush.bf16.msra.mxu0 0
        %631 = vmatpush.bf16.msra.mxu0 0
        %632 = vmatpush.bf16.msra.mxu0 %v623
        %633 = vmatmul.bf16.gmra.mxu0 %v322
        %v634 = vpop.f32.mrf.mxu0
        %v635 = vadd.f32 0.0, %v634
        %v636 = vpop.f32.mrf.mxu0
        %v637 = vadd.f32 0.0, %v636
        %638 = vmatmul.bf16.gmra.mxu0 %v325
        %v639 = vpop.f32.mrf.mxu0
        %v640 = vadd.f32 0.0, %v639
        %v641 = vpop.f32.mrf.mxu0
        %v642 = vadd.f32 0.0, %v641
        %643 = vdwg.mxu0
        %v644 = vmax.f32 %v635, 0.0
        %v645 = vmax.f32 %v637, 0.0
        %v646 = vmax.f32 %v640, 0.0
        %v647 = vmax.f32 %v642, 0.0
        %648 = vadd.xlane.f32.xlu0 %v644
        %v649 = vpop.xlane.xlu0 %648
        %650 = vadd.xlane.f32.xlu0 %v645
        %v651 = vpop.xlane.xlu0 %650
        %652 = vadd.xlane.f32.xlu0 %v646
        %v653 = vpop.xlane.xlu0 %652
        %654 = vadd.xlane.f32.xlu0 %v647
        %v655 = vpop.xlane.xlu0 %654
        %vm656 = vcmp.eq.s32.totalorder %v308, 5
        %v661 = vperm.slane %v649, %v368
        %v662 = vperm.slane %v651, %v370
        %v663 = vsel %vm372, %v662, %v661
        %v664 = vperm.slane %v653, %v374
        %v665 = vsel %vm376, %v664, %v663
        %v666 = vperm.slane %v655, %v378
        %v667 = vsel %vm380, %v666, %v665
        %v668 = vsel %vm382, %v667, %v667
        %v669 = vsel %vm384, %v667, %v668
        %v670 = vsel %vm386, %v667, %v669
        %v671 = vsel %vm388, %v667, %v670
        %v672 = vsel %vm390, %v667, %v671
        %v673 = vsel %vm392, %v667, %v672
        %v675 = vsel %vm656, %v673, %v619
        %s676 = scalar_lea.vmem %s261, 12 [#allocation2]
        %v677 = vld [vmem:[%s676] sm:$0x3]
        %v679 = vsel %vm327, %v677, 0
        %681 = vmatpush.bf16.msra.mxu0 0
        %682 = vmatpush.bf16.msra.mxu0 0
        %683 = vmatpush.bf16.msra.mxu0 0
        %684 = vmatpush.bf16.msra.mxu0 0
        %685 = vmatpush.bf16.msra.mxu0 0
        %686 = vmatpush.bf16.msra.mxu0 0
        %687 = vmatpush.bf16.msra.mxu0 0
        %688 = vmatpush.bf16.msra.mxu0 %v679
        %689 = vmatmul.bf16.gmra.mxu0 %v322
        %v690 = vpop.f32.mrf.mxu0
        %v691 = vadd.f32 0.0, %v690
        %v692 = vpop.f32.mrf.mxu0
        %v693 = vadd.f32 0.0, %v692
        %694 = vmatmul.bf16.gmra.mxu0 %v325
        %v695 = vpop.f32.mrf.mxu0
        %v696 = vadd.f32 0.0, %v695
        %v697 = vpop.f32.mrf.mxu0
        %v698 = vadd.f32 0.0, %v697
        %699 = vdwg.mxu0
        %v700 = vmax.f32 %v691, 0.0
        %v701 = vmax.f32 %v693, 0.0
        %v702 = vmax.f32 %v696, 0.0
        %v703 = vmax.f32 %v698, 0.0
        %704 = vadd.xlane.f32.xlu0 %v700
        %v705 = vpop.xlane.xlu0 %704
        %706 = vadd.xlane.f32.xlu0 %v701
        %v707 = vpop.xlane.xlu0 %706
        %708 = vadd.xlane.f32.xlu0 %v702
        %v709 = vpop.xlane.xlu0 %708
        %710 = vadd.xlane.f32.xlu0 %v703
        %v711 = vpop.xlane.xlu0 %710
        %vm712 = vcmp.eq.s32.totalorder %v308, 6
        %v717 = vperm.slane %v705, %v368
        %v718 = vperm.slane %v707, %v370
        %v719 = vsel %vm372, %v718, %v717
        %v720 = vperm.slane %v709, %v374
        %v721 = vsel %vm376, %v720, %v719
        %v722 = vperm.slane %v711, %v378
        %v723 = vsel %vm380, %v722, %v721
        %v724 = vsel %vm382, %v723, %v723
        %v725 = vsel %vm384, %v723, %v724
        %v726 = vsel %vm386, %v723, %v725
        %v727 = vsel %vm388, %v723, %v726
        %v728 = vsel %vm390, %v723, %v727
        %v729 = vsel %vm392, %v723, %v728
        %v731 = vsel %vm712, %v729, %v675
        %s732 = scalar_lea.vmem %s261, 14 [#allocation2]
        %v733 = vld [vmem:[%s732] sm:$0x3]
        %v735 = vsel %vm327, %v733, 0
        %737 = vmatpush.bf16.msra.mxu0 0
        %738 = vmatpush.bf16.msra.mxu0 0
        %739 = vmatpush.bf16.msra.mxu0 0
        %740 = vmatpush.bf16.msra.mxu0 0
        %741 = vmatpush.bf16.msra.mxu0 0
        %742 = vmatpush.bf16.msra.mxu0 0
        %743 = vmatpush.bf16.msra.mxu0 0
        %744 = vmatpush.bf16.msra.mxu0 %v735
        %745 = vmatmul.bf16.gmra.mxu0 %v322
        %v746 = vpop.f32.mrf.mxu0
        %v747 = vadd.f32 0.0, %v746
        %v748 = vpop.f32.mrf.mxu0
        %v749 = vadd.f32 0.0, %v748
        %750 = vmatmul.bf16.gmra.mxu0 %v325
        %v751 = vpop.f32.mrf.mxu0
        %v752 = vadd.f32 0.0, %v751
        %v753 = vpop.f32.mrf.mxu0
        %v754 = vadd.f32 0.0, %v753
        %755 = vdwg.mxu0
        %v756 = vmax.f32 %v747, 0.0
        %v757 = vmax.f32 %v749, 0.0
        %v758 = vmax.f32 %v752, 0.0
        %v759 = vmax.f32 %v754, 0.0
        %760 = vadd.xlane.f32.xlu0 %v756
        %v761 = vpop.xlane.xlu0 %760
        %762 = vadd.xlane.f32.xlu0 %v757
        %v763 = vpop.xlane.xlu0 %762
        %764 = vadd.xlane.f32.xlu0 %v758
        %v765 = vpop.xlane.xlu0 %764
        %766 = vadd.xlane.f32.xlu0 %v759
        %v767 = vpop.xlane.xlu0 %766
        %vm768 = vcmp.eq.s32.totalorder %v308, 7
        %v773 = vperm.slane %v761, %v368
        %v774 = vperm.slane %v763, %v370
        %v775 = vsel %vm372, %v774, %v773
        %v776 = vperm.slane %v765, %v374
        %v777 = vsel %vm376, %v776, %v775
        %v778 = vperm.slane %v767, %v378
        %v779 = vsel %vm380, %v778, %v777
        %v780 = vsel %vm382, %v779, %v779
        %v781 = vsel %vm384, %v779, %v780
        %v782 = vsel %vm386, %v779, %v781
        %v783 = vsel %vm388, %v779, %v782
        %v784 = vsel %vm390, %v779, %v783
        %v785 = vsel %vm392, %v779, %v784
        %v787 = vsel %vm768, %v785, %v731
        %v788 = vld [vmem:[%s291] sm:$0xff]
        %v789 = vadd.f32 %v788, %v787
        %vm790 = vcmask 261120
        %791 = vst.msk [vmem:[%s291] sm:$0xff] %vm790, %v789
        %p792 = scmp.eq.s32.totalorder %s21, 1
        // Predicated region
        $region78: #{t3a_forward.2} parent=68 // pred_check
          %p793 = pneg %p792
        $region79: #{t3a_forward.2} parent=68 // pred_check_branch
          %795 = sbr.rel (%p793) target = $region81
        $region80: #{t3a_forward.2} parent=68 // pred_region
          %v796 = vld [vmem:[%s291] sm:$0xff]
          %v797 = vmul.f32 %v796, 0.00390625
          %798 = vst.msk [vmem:[%s291] sm:$0xff] %vm790, %v797
          %v799 = vld [vmem:[%s2] sm:$0xff]
          %v800 = vld [vmem:[%s2 + $0x8] sm:$0xff]
          %v801 = vld [vmem:[%s2 + $0x10] sm:$0xff]
          %v802 = vld [vmem:[%s2 + $0x18] sm:$0xff]
          %v804 = vsel %vm790, %v797, 0
          %806 = vmatpush.msra.mxu0 0.0
          %807 = vmatpush.msra.mxu0 0.0
          %808 = vmatpush.msra.mxu0 0.0
          %809 = vmatpush.msra.mxu0 0.0
          %810 = vmatpush.msra.mxu0 0.0
          %811 = vmatpush.msra.mxu0 0.0
          %812 = vmatpush.msra.mxu0 0.0
          %813 = vmatpush.msra.mxu0 0.0
          %814 = vmatpush.msra.mxu0 0.0
          %815 = vmatpush.msra.mxu0 0.0
          %816 = vmatpush.msra.mxu0 0.0
          %817 = vmatpush.msra.mxu0 0.0
          %818 = vmatpush.msra.mxu0 %v802
          %819 = vmatpush.msra.mxu0 %v801
          %820 = vmatpush.msra.mxu0 %v800
          %821 = vmatpush.msra.mxu0 %v799
          %822 = vmatmul.f32.gmra.mxu0 %v804
          %v823 = vpop.f32.mrf.mxu0
          %v824 = vadd.f32 0.0, %v823
          %825 = vdwg.mxu0
          %vm826 = vcmask 64512
          %v827 = vsel %vm826, %v824, -inf
          %828 = vmax.xlane.f32.xlu0 %v827
          %v829 = vpop.xlane.xlu0 %828
          %v830 = vsub.f32 %v824, %v829
          %v831 = vmul.f32 %v830, 1.442695
          %v832 = vpow.pop %v831
          %v833 = vsel %vm826, %v832, 0.0
          %834 = vadd.xlane.f32.xlu0 %v833
          %v835 = vpop.xlane.xlu0 %834
          %v836 = vlog2.pop %v835
          %v837 = vmul.f32 %v836, 0.6931472
          %v838 = vadd.f32 %v829, %v837
          %v839 = vrcp.pop %v835
          %v840 = vmul.f32 %v835, %v839
          %v841 = vsub.f32 1.0, %v840
          %v842 = vmul.f32 %v839, %v841
          %v843 = vadd.f32 %v839, %v842
          %vm844 = vweird.f32 %v835
          %vm845 = vweird.f32 %v839
          %vm846 = vmor %vm844, %vm845
          %v847 = vsel %vm846, %v839, %v843
          %v848 = vand.u32 2147483647, %v835
          %vm849 = vcmp.eq.f32.partialorder %v848, 8.507059e+37
          %v850 = vand.u32 %v835, 2147483648
          %v851 = vor.u32 1.1754944e-38, %v850
          %v852 = vsel %vm849, %v851, %v847
          %v853 = vmul.f32 %v832, %v852
          %v854 = vmul.f32 %v853, %v824
          %v855 = vsel %vm826, %v854, 0.0
          %856 = vadd.xlane.f32.xlu0 %v855
          %v857 = vpop.xlane.xlu0 %856
          %v858 = vsub.f32 %v838, %v857
          %vm859 = vcmp.ge.f32.partialorder %v824, %v829
          %v860 = vsel %vm859, %v368, 8
          %v861 = vsel %vm826, %v860, 2147483647
          %v862 = vand.u32 %v861, 65535
          %v863 = vshra.s32 %v861, 16
          %v864 = vcvt.s32.f32 %v862
          %v865 = vcvt.s32.f32 %v863
          %866 = vmin.xlane.f32.xlu0 %v865
          %v867 = vpop.xlane.xlu0 %866
          %vm868 = vcmp.eq.f32.partialorder %v865, %v867
          %v869 = vsel %vm868, %v864, inf
          %870 = vmin.xlane.f32.xlu0 %v869
          %v871 = vpop.xlane.xlu0 %870
          %v872 = vcvt.f32.s32 %v871
          %v873 = vcvt.f32.s32 %v867
          %v874 = vshll.u32 %v873, 16
          %v875 = vadd.s32 %v874, %v872
          %vm876 = vcmp.eq.s32.totalorder %v368, %v875
          %v877 = vsel %vm876, 1, 0
          %v878 = vcvt.s32.f32 %v877
          %vm879 = vcmp.eq.s32.totalorder %v368, 8
          %v880 = vsel %vm879, 1, 0
          %v881 = vcvt.s32.f32 %v880
          %v882 = vmul.f32 %v858, %v881
          %v883 = vadd.f32 %v878, %v882
          %884 = vst [vmem:[%s295] sm:$0xff] %v883
        $region81: #{t3a_forward.2} parent=68 // pred_fallthru
          _
        %p885 = scmp.lt.s32.totalorder %s20, 0
        %s886 = scalar_select %p885, %s20, 0
        %s887 = smul.addr %s886, 8
        %s888 = scalar_lea.vmem %s3, %s887
        %p889 = scmp.lt.s32.totalorder %s20, 0
        %s890 = scalar_select %p889, %s20, 0
        %s891 = smul.addr %s890, 8
        %s892 = scalar_lea.vmem %s4, %s891
        // Predicated region
        $region82: #{t3a_forward.2} parent=68 // pred_check
          %p893 = pneg %p116
        $region83: #{t3a_forward.2} parent=68 // pred_check_branch
          %895 = sbr.rel (%p893) target = $region85
        $region84: #{t3a_forward.2} parent=68 // pred_region
          _
        $region85: #{t3a_forward.2} parent=68 // pred_fallthru
          _
        // Predicated region
        $region86: #{t3a_forward.2} parent=68 // pred_check
          %p896 = pneg %p142
        $region87: #{t3a_forward.2} parent=68 // pred_check_branch
          %898 = sbr.rel (%p896) target = $region89
        $region88: #{t3a_forward.2} parent=68 // pred_region
          _
        $region89: #{t3a_forward.2} parent=68 // pred_fallthru
          _
        // Predicated region
        $region90: #{t3a_forward.2} parent=68 // pred_check
          %p899 = pneg %p116
        $region91: #{t3a_forward.2} parent=68 // pred_check_branch
          %901 = sbr.rel (%p899) target = $region93
        $region92: #{t3a_forward.2} parent=68 // pred_region
          %p902 = scmp.lt.s32.totalorder %s20, 0
          %s903 = scalar_select %p902, %s20, 0
          %s904 = smul.addr %s903, 8
          %s905 = scalar_lea.vmem %s3, %s904
        $region93: #{t3a_forward.2} parent=68 // pred_fallthru
          _
        // Predicated region
        $region94: #{t3a_forward.2} parent=68 // pred_check
          %p906 = pneg %p142
        $region95: #{t3a_forward.2} parent=68 // pred_check_branch
          %908 = sbr.rel (%p906) target = $region97
        $region96: #{t3a_forward.2} parent=68 // pred_region
          %p909 = scmp.lt.s32.totalorder %s20, 0
          %s910 = scalar_select %p909, %s20, 0
          %s911 = smul.addr %s910, 8
          %s912 = scalar_lea.vmem %s4, %s911
        $region97: #{t3a_forward.2} parent=68 // pred_fallthru
          _
      $region69: #{t3a_forward.2} parent=5 // pred_fallthru
        _
      %p913 = scmp.le.s32.totalorder 2, %s11
      // Predicated region
      $region98: #{t3a_forward.2} parent=5 // pred_check
        %p914 = pneg %p913
      $region99: #{t3a_forward.2} parent=5 // pred_check_branch
        %916 = sbr.rel (%p914) target = $region101
      $region100: #{t3a_forward.2} parent=5 // pred_region
        %s917 = ssub.s32 %s11, 2
      $region101: #{t3a_forward.2} parent=5 // pred_fallthru
        _
    $region6: #{t3a_forward.2} parent=1 // loop_footer
      %s15 = sadd.s32 1, %s11
    $region7: #{t3a_forward.2} parent=1 // loop_footer_branch
      %10 = sbr.rel target = $region3
    $region8: #{t3a_forward.2} parent=1 // loop_exit
      _

</llo_original>
